<compile_context>
chip_gen: v7x
topology: tpu7x:2x2x1
jax: 0.10.0
libtpu: 0.0.40
codegen_flags: <defaults>
</compile_context>

<pallas_src>
import functools

import jax
import jax.numpy as jnp
from jax.experimental import pallas as pl
from jax.experimental.pallas import tpu as pltpu

_LANE = 128


def _round_up(a, b):
    return (a + b - 1) // b * b


def _pick_n_tile(T, H, N):
    # f32, double-buffered: xg (T,6H,nt) in + out (T,2H,nt) -> 8H*T*4*2 B/lane.
    per_lane = T * 8 * H * 4 * 2
    budget = 16 * 1024 * 1024
    cap = max(_LANE, min(512, (budget // max(per_lane, 1)) // _LANE * _LANE))
    return int(min(cap, _round_up(max(N, 1), _LANE)))


# -----------------------------------------------------------------------------
# Pallas kernel: fused fwd+bwd GRU recurrence for one lane-tile of sequences.
#
#   xg_ref : (T, 6H, Nt)  W_ih x_t + folded biases, gate-row layout
#                         [r_f, r_b, z_f, z_b, n_f, n_b]; backward rows are
#                         already time-reversed on the host.
#   whh_ref: (6H, 2H)     block-diagonal recurrent weights (fwd cols 0:H,
#                         bwd cols H:2H), same gate-row layout.
#   bhn_ref: (2H, Nt)     candidate-gate recurrent bias, pre-broadcast.
#   out_ref: (T, 2H, Nt)  hidden states, [fwd | bwd] per time step.
#
# PyTorch GRU gate math (per direction):
#   r = sigmoid(Wir x + bir + Whr h + bhr)
#   z = sigmoid(Wiz x + biz + Whz h + bhz)
#   n = tanh   (Win x + bin + r * (Whn h + bhn))
#   h = (1 - z) * n + z * h
# -----------------------------------------------------------------------------
def _bigru_kernel(xg_ref, whh_ref, bhn_ref, out_ref):
    T = xg_ref.shape[0]
    H2 = out_ref.shape[1]          # 2H (fwd + bwd stacked)
    H = H2 // 2

    whh = whh_ref[...]             # hoisted out of the unrolled loop
    bhn = bhn_ref[...]

    # ---- peeled first step: h == 0 => recurrent matmul vanishes ------------
    xg0 = xg_ref[0]
    r0 = jax.nn.sigmoid(xg0[0:H2])
    z0 = jax.nn.sigmoid(xg0[H2:2 * H2])
    n0 = jnp.tanh(xg0[2 * H2:3 * H2] + r0 * bhn)
    h = (1.0 - z0) * n0
    out_ref[0, 0:H, :] = h[0:H]
    out_ref[T - 1, H:H2, :] = h[H:H2]

    # ---- remaining steps: fully unrolled, static addressing ----------------
    for t in range(1, T):
        hg = jnp.dot(whh, h, preferred_element_type=jnp.float32)   # (6H, Nt)
        xg = xg_ref[t]
        r = jax.nn.sigmoid(xg[0:H2] + hg[0:H2])
        z = jax.nn.sigmoid(xg[H2:2 * H2] + hg[H2:2 * H2])
        # "+ bhn" is off the critical path (hidden under the sigmoid latency).
        n = jnp.tanh(xg[2 * H2:3 * H2] + r * (hg[2 * H2:3 * H2] + bhn))
        h = (1.0 - z) * n + z * h
        out_ref[t, 0:H, :] = h[0:H]                 # fwd state at time t
        out_ref[T - 1 - t, H:H2, :] = h[H:H2]       # bwd state at time T-1-t


# -----------------------------------------------------------------------------
# Host-side packing + pallas_call wrapper.
# -----------------------------------------------------------------------------
def _pack_bigru_params(p, H):
    f32 = jnp.float32

    def interleave(a_f, a_b):
        # (3H, ...) per direction -> (6H, ...) rows [r_f, r_b, z_f, z_b, n_f, n_b].
        tail = a_f.shape[1:]
        return jnp.concatenate(
            [a_f.reshape((3, H) + tail), a_b.reshape((3, H) + tail)],
            axis=1).reshape((6 * H,) + tail)

    def fold_bias(bih, bhh):
        # b_ih + (r/z parts of b_hh) fold into the input projection;
        # b_hn must stay inside r * (Whn h + bhn).
        return bih + jnp.concatenate([bhh[:2 * H], jnp.zeros((H,), bhh.dtype)])

    wih = interleave(p["wih_f"], p["wih_b"]).astype(f32)                 # (6H, F)
    bias = interleave(fold_bias(p["bih_f"], p["bhh_f"]),
                      fold_bias(p["bih_b"], p["bhh_b"])).astype(f32)     # (6H,)
    zero = jnp.zeros((3, H, H), f32)
    whh = jnp.concatenate(
        [jnp.concatenate([p["whh_f"].astype(f32).reshape(3, H, H), zero], axis=2),
         jnp.concatenate([zero, p["whh_b"].astype(f32).reshape(3, H, H)], axis=2)],
        axis=1).reshape(6 * H, 2 * H)                                    # block-diag
    bhn = jnp.concatenate([p["bhh_f"][2 * H:], p["bhh_b"][2 * H:]]).astype(f32)
    return wih, bias, whh, bhn


def _bigru(inp, params, eq, T, N):
    """Bidirectional GRU. `eq` maps (inp, wih(6H,F)) -> (T, 6H, ...batch...),
    reshaped to (T, 6H, N).  Returns (T, 2H, N) with [fwd | bwd] stacked on the
    feature axis and the sequence index N kept lane-minor."""
    H = params["whh_f"].shape[1]
    wih, bias, whh, bhn = _pack_bigru_params(params, H)

    # Single hoisted input GEMM for both directions, straight into the
    # kernel's lane-minor layout.
    xg = jnp.einsum(eq, inp.astype(jnp.float32), wih,
                    preferred_element_type=jnp.float32)
    xg = xg.reshape(T, 6 * H, N) + bias[None, :, None]
    # Time-reverse the backward-direction gate rows so the kernel walks both
    # chains with one forward time index.
    bwd_rows = ((jnp.arange(6 * H) // H) % 2) == 1
    xg = jnp.where(bwd_rows[None, :, None], xg[::-1], xg)

    n_tile = _pick_n_tile(T, H, N)
    n_pad = _round_up(N, n_tile)
    if n_pad != N:
        xg = jnp.pad(xg, ((0, 0), (0, 0), (0, n_pad - N)))
    bhn_b = jnp.broadcast_to(bhn[:, None], (2 * H, n_pad))

    out = pl.pallas_call(
        _bigru_kernel,
        out_shape=jax.ShapeDtypeStruct((T, 2 * H, n_pad), jnp.float32),
        grid_spec=pltpu.PrefetchScalarGridSpec(
            num_scalar_prefetch=0,
            grid=(n_pad // n_tile,),
            in_specs=[
                pl.BlockSpec((T, 6 * H, n_tile), lambda nb: (0, 0, nb)),
                pl.BlockSpec((6 * H, 2 * H), lambda nb: (0, 0)),
                pl.BlockSpec((2 * H, n_tile), lambda nb: (0, nb)),
            ],
            out_specs=pl.BlockSpec((T, 2 * H, n_tile), lambda nb: (0, 0, nb)),
        ),
        compiler_params=pltpu.CompilerParams(
            dimension_semantics=("parallel",)),
    )(xg, whh, bhn_b)
    return out[:, :, :N]


# -----------------------------------------------------------------------------
# ReNet glue (tiling / coordinates) — plain JAX, mirrors PyTorch semantics.
# -----------------------------------------------------------------------------
def _tile(x, ph, pw):
    b, c, h, w = x.shape
    hp = (ph - h % ph) % ph
    wp = (pw - w % pw) % pw
    top, left = hp // 2, wp // 2
    x = jnp.pad(x, ((0, 0), (0, 0), (top, hp - top), (left, wp - left)))
    b, c, h, w = x.shape
    nh, nw = h // ph, w // pw
    x = x.reshape(b, c, nh, ph, nw, pw)
    x = x.transpose(0, 2, 4, 1, 3, 5)
    x = x.reshape(b, nh, nw, ph * pw * c)
    return x.transpose(0, 3, 1, 2)


def _add_coordinates(x):
    b, _, h, w = x.shape
    yc = 2.0 * jnp.arange(h, dtype=jnp.float32)[:, None] / max(h - 1.0, 1.0) - 1.0
    yc = jnp.broadcast_to(yc, (h, w))
    xc = 2.0 * jnp.arange(w, dtype=jnp.float32)[None, :] / max(w - 1.0, 1.0) - 1.0
    xc = jnp.broadcast_to(xc, (h, w))
    rs = jnp.sqrt(yc ** 2 + xc ** 2)
    rs = rs / jnp.max(rs)
    coords = jnp.stack([yc, xc, rs], axis=0)                      # (3, h, w)
    coords = jnp.broadcast_to(coords[None], (b, 3, h, w))
    return jnp.concatenate([coords, x], axis=1)


def renet_forward(x, hor_params, ver_params, patch_size=(2, 2),
                  use_coordinates=True):
    ph, pw = patch_size
    if not (ph == 1 and pw == 1):
        x = _tile(x, ph, pw)
    if use_coordinates:
        x = _add_coordinates(x)
    b, _, h, w = x.shape
    H = hor_params["whh_f"].shape[1]

    # Horizontal pass: sequences along w, one per (batch, row).
    out_h = _bigru(x, hor_params, "bchw,gc->wgbh", w, b * h)       # (w, 2H, b*h)
    out_h = out_h.reshape(w, 2 * H, b, h)

    # Vertical pass: sequences along h, one per (batch, col).  Consumes the
    # lane-minor horizontal output directly — the h<->w role swap is absorbed
    # by this input GEMM (no NCHW transpose round-trip between passes).
    out_v = _bigru(out_h, ver_params, "wcbh,gc->hgbw", h, b * w)   # (h, 2H, b*w)
    out_v = out_v.reshape(h, 2 * H, b, w)
    return out_v.transpose(2, 1, 0, 3)                             # (b, 2H, h, w)


# -----------------------------------------------------------------------------
# Deterministic parameter init (PyTorch GRU default: U(-1/sqrt(H), 1/sqrt(H))).
# -----------------------------------------------------------------------------
def _init_gru_params(key, in_features, hidden):
    k = 1.0 / jnp.sqrt(jnp.float32(hidden))
    names_shapes = [
        ("wih_f", (3 * hidden, in_features)), ("whh_f", (3 * hidden, hidden)),
        ("bih_f", (3 * hidden,)), ("bhh_f", (3 * hidden,)),
        ("wih_b", (3 * hidden, in_features)), ("whh_b", (3 * hidden, hidden)),
        ("bih_b", (3 * hidden,)), ("bhh_b", (3 * hidden,)),
    ]
    keys = jax.random.split(key, len(names_shapes))
    return {
        name: jax.random.uniform(kk, shape, jnp.float32, -k, k)
        for kk, (name, shape) in zip(keys, names_shapes)
    }


if __name__ == "__main__":
    # ReNet(n_input=4, n_units=8, patch_size=(2, 2), use_coordinates=True)
    n_input, n_units = 4, 8
    patch_size = (2, 2)
    use_coordinates = True

    rnn_hor_in = n_input * patch_size[0] * patch_size[1] + (3 if use_coordinates else 0)
    rnn_ver_in = 2 * n_units

    root = jax.random.PRNGKey(0)
    k_x, k_hor, k_ver = jax.random.split(root, 3)

    x = jax.random.normal(k_x, (2, n_input, 16, 16), dtype=jnp.float32)   # NCHW
    hor_params = _init_gru_params(k_hor, rnn_hor_in, n_units)
    ver_params = _init_gru_params(k_ver, rnn_ver_in, n_units)

    fwd = jax.jit(functools.partial(
        renet_forward, patch_size=patch_size, use_coordinates=use_coordinates))
    out = fwd(x, hor_params, ver_params)
    out = jax.block_until_ready(out)

    expected = (2, 2 * n_units, 16 // patch_size[0], 16 // patch_size[1])
    assert out.shape == expected, out.shape
    assert bool(jnp.all(jnp.isfinite(out)))
    print("KERNEL_OK")
</pallas_src>

<mosaic_0001>
module attributes {stable_mosaic.version = 11 : i64} {
  func.func @_bigru_kernel(%arg0: i32, %arg1: memref<8x48x128xf32, #tpu.memory_space<vmem>>, %arg2: memref<48x16xf32, #tpu.memory_space<vmem>>, %arg3: memref<16x128xf32, #tpu.memory_space<vmem>>, %arg4: memref<8x16x128xf32, #tpu.memory_space<vmem>>) attributes {dimension_semantics = [#tpu.dimension_semantics<parallel>], iteration_bounds = array<i64: 1>, scalar_prefetch = 0 : i64, scratch_operands = 0 : i64, tpu.core_type = #tpu.core_type<tc>, window_params = [{transform_indices = @transform_0, window_bounds = array<i64: 8, 48, 128>}, {pipeline_mode = #tpu.pipeline_mode<synchronous>, transform_indices = @transform_1, window_bounds = array<i64: 48, 16>}, {transform_indices = @transform_2, window_bounds = array<i64: 16, 128>}, {transform_indices = @transform_3, window_bounds = array<i64: 8, 16, 128>}]} {
    %c0 = arith.constant 0 : index
    %c0_0 = arith.constant 0 : index
    %0 = vector.load %arg2[%c0, %c0_0] : memref<48x16xf32, #tpu.memory_space<vmem>>, vector<48x16xf32>
    %c0_1 = arith.constant 0 : index
    %c0_2 = arith.constant 0 : index
    %1 = vector.load %arg3[%c0_1, %c0_2] : memref<16x128xf32, #tpu.memory_space<vmem>>, vector<16x128xf32>
    %c0_3 = arith.constant 0 : index
    %c0_4 = arith.constant 0 : index
    %c0_5 = arith.constant 0 : index
    %2 = vector.load %arg1[%c0_3, %c0_4, %c0_5] : memref<8x48x128xf32, #tpu.memory_space<vmem>>, vector<1x48x128xf32>
    %3 = vector.shape_cast %2 : vector<1x48x128xf32> to vector<48x128xf32>
    %4 = vector.extract_strided_slice %3 {offsets = [0, 0], sizes = [16, 128], strides = [1, 1]} : vector<48x128xf32> to vector<16x128xf32>
    %5 = arith.negf %4 : vector<16x128xf32>
    %6 = math.exp %5 : vector<16x128xf32>
    %cst = arith.constant 1.000000e+00 : f32
    %7 = vector.broadcast %cst : f32 to vector<16x128xf32>
    %8 = arith.addf %7, %6 : vector<16x128xf32>
    %9 = arith.divf %7, %8 : vector<16x128xf32>
    %10 = vector.extract_strided_slice %3 {offsets = [16, 0], sizes = [16, 128], strides = [1, 1]} : vector<48x128xf32> to vector<16x128xf32>
    %11 = arith.negf %10 : vector<16x128xf32>
    %12 = math.exp %11 : vector<16x128xf32>
    %cst_6 = arith.constant 1.000000e+00 : f32
    %13 = vector.broadcast %cst_6 : f32 to vector<16x128xf32>
    %14 = arith.addf %13, %12 : vector<16x128xf32>
    %15 = arith.divf %13, %14 : vector<16x128xf32>
    %16 = vector.extract_strided_slice %3 {offsets = [32, 0], sizes = [16, 128], strides = [1, 1]} : vector<48x128xf32> to vector<16x128xf32>
    %17 = arith.mulf %9, %1 : vector<16x128xf32>
    %18 = arith.addf %16, %17 : vector<16x128xf32>
    %19 = math.tanh %18 : vector<16x128xf32>
    %cst_7 = arith.constant 1.000000e+00 : f32
    %20 = vector.broadcast %cst_7 : f32 to vector<16x128xf32>
    %21 = arith.subf %20, %15 : vector<16x128xf32>
    %22 = arith.mulf %21, %19 : vector<16x128xf32>
    %23 = vector.extract_strided_slice %22 {offsets = [0, 0], sizes = [8, 128], strides = [1, 1]} : vector<16x128xf32> to vector<8x128xf32>
    %c0_8 = arith.constant 0 : index
    %c0_9 = arith.constant 0 : index
    %c0_10 = arith.constant 0 : index
    %24 = vector.load %arg4[%c0_8, %c0_9, %c0_10] : memref<8x16x128xf32, #tpu.memory_space<vmem>>, vector<1x8x128xf32>
    %25 = vector.shape_cast %24 : vector<1x8x128xf32> to vector<8x128xf32>
    %26 = vector.shape_cast %23 : vector<8x128xf32> to vector<1x8x128xf32>
    tpu.vector_store %arg4[%c0_8, %c0_9, %c0_10], %26 {strides = array<i32>} : memref<8x16x128xf32, #tpu.memory_space<vmem>>, vector<1x8x128xf32>,
    %27 = vector.extract_strided_slice %22 {offsets = [8, 0], sizes = [8, 128], strides = [1, 1]} : vector<16x128xf32> to vector<8x128xf32>
    %c7 = arith.constant 7 : index
    %c8 = arith.constant 8 : index
    %c0_11 = arith.constant 0 : index
    %28 = vector.load %arg4[%c7, %c8, %c0_11] : memref<8x16x128xf32, #tpu.memory_space<vmem>>, vector<1x8x128xf32>
    %29 = vector.shape_cast %28 : vector<1x8x128xf32> to vector<8x128xf32>
    %30 = vector.shape_cast %27 : vector<8x128xf32> to vector<1x8x128xf32>
    tpu.vector_store %arg4[%c7, %c8, %c0_11], %30 {strides = array<i32>} : memref<8x16x128xf32, #tpu.memory_space<vmem>>, vector<1x8x128xf32>,
    %cst_12 = arith.constant dense<0.000000e+00> : vector<48x128xf32>
    %31 = tpu.matmul %0, %22, %cst_12 {dimension_numbers = #tpu.dot_dimension_numbers<[1], [0], [0], [1], [0, 0, 1, 1], [], []>} : vector<48x16xf32>, vector<16x128xf32>, vector<48x128xf32> -> vector<48x128xf32>
    %c1 = arith.constant 1 : index
    %c0_13 = arith.constant 0 : index
    %c0_14 = arith.constant 0 : index
    %32 = vector.load %arg1[%c1, %c0_13, %c0_14] : memref<8x48x128xf32, #tpu.memory_space<vmem>>, vector<1x48x128xf32>
    %33 = vector.shape_cast %32 : vector<1x48x128xf32> to vector<48x128xf32>
    %34 = vector.extract_strided_slice %33 {offsets = [0, 0], sizes = [16, 128], strides = [1, 1]} : vector<48x128xf32> to vector<16x128xf32>
    %35 = vector.extract_strided_slice %31 {offsets = [0, 0], sizes = [16, 128], strides = [1, 1]} : vector<48x128xf32> to vector<16x128xf32>
    %36 = arith.addf %34, %35 : vector<16x128xf32>
    %37 = arith.negf %36 : vector<16x128xf32>
    %38 = math.exp %37 : vector<16x128xf32>
    %cst_15 = arith.constant 1.000000e+00 : f32
    %39 = vector.broadcast %cst_15 : f32 to vector<16x128xf32>
    %40 = arith.addf %39, %38 : vector<16x128xf32>
    %41 = arith.divf %39, %40 : vector<16x128xf32>
    %42 = vector.extract_strided_slice %33 {offsets = [16, 0], sizes = [16, 128], strides = [1, 1]} : vector<48x128xf32> to vector<16x128xf32>
    %43 = vector.extract_strided_slice %31 {offsets = [16, 0], sizes = [16, 128], strides = [1, 1]} : vector<48x128xf32> to vector<16x128xf32>
    %44 = arith.addf %42, %43 : vector<16x128xf32>
    %45 = arith.negf %44 : vector<16x128xf32>
    %46 = math.exp %45 : vector<16x128xf32>
    %cst_16 = arith.constant 1.000000e+00 : f32
    %47 = vector.broadcast %cst_16 : f32 to vector<16x128xf32>
    %48 = arith.addf %47, %46 : vector<16x128xf32>
    %49 = arith.divf %47, %48 : vector<16x128xf32>
    %50 = vector.extract_strided_slice %33 {offsets = [32, 0], sizes = [16, 128], strides = [1, 1]} : vector<48x128xf32> to vector<16x128xf32>
    %51 = vector.extract_strided_slice %31 {offsets = [32, 0], sizes = [16, 128], strides = [1, 1]} : vector<48x128xf32> to vector<16x128xf32>
    %52 = arith.addf %51, %1 : vector<16x128xf32>
    %53 = arith.mulf %41, %52 : vector<16x128xf32>
    %54 = arith.addf %50, %53 : vector<16x128xf32>
    %55 = math.tanh %54 : vector<16x128xf32>
    %cst_17 = arith.constant 1.000000e+00 : f32
    %56 = vector.broadcast %cst_17 : f32 to vector<16x128xf32>
    %57 = arith.subf %56, %49 : vector<16x128xf32>
    %58 = arith.mulf %57, %55 : vector<16x128xf32>
    %59 = arith.mulf %49, %22 : vector<16x128xf32>
    %60 = arith.addf %58, %59 : vector<16x128xf32>
    %61 = vector.extract_strided_slice %60 {offsets = [0, 0], sizes = [8, 128], strides = [1, 1]} : vector<16x128xf32> to vector<8x128xf32>
    %c1_18 = arith.constant 1 : index
    %c0_19 = arith.constant 0 : index
    %c0_20 = arith.constant 0 : index
    %62 = vector.load %arg4[%c1_18, %c0_19, %c0_20] : memref<8x16x128xf32, #tpu.memory_space<vmem>>, vector<1x8x128xf32>
    %63 = vector.shape_cast %62 : vector<1x8x128xf32> to vector<8x128xf32>
    %64 = vector.shape_cast %61 : vector<8x128xf32> to vector<1x8x128xf32>
    tpu.vector_store %arg4[%c1_18, %c0_19, %c0_20], %64 {strides = array<i32>} : memref<8x16x128xf32, #tpu.memory_space<vmem>>, vector<1x8x128xf32>,
    %65 = vector.extract_strided_slice %60 {offsets = [8, 0], sizes = [8, 128], strides = [1, 1]} : vector<16x128xf32> to vector<8x128xf32>
    %c6 = arith.constant 6 : index
    %c8_21 = arith.constant 8 : index
    %c0_22 = arith.constant 0 : index
    %66 = vector.load %arg4[%c6, %c8_21, %c0_22] : memref<8x16x128xf32, #tpu.memory_space<vmem>>, vector<1x8x128xf32>
    %67 = vector.shape_cast %66 : vector<1x8x128xf32> to vector<8x128xf32>
    %68 = vector.shape_cast %65 : vector<8x128xf32> to vector<1x8x128xf32>
    tpu.vector_store %arg4[%c6, %c8_21, %c0_22], %68 {strides = array<i32>} : memref<8x16x128xf32, #tpu.memory_space<vmem>>, vector<1x8x128xf32>,
    %cst_23 = arith.constant dense<0.000000e+00> : vector<48x128xf32>
    %69 = tpu.matmul %0, %60, %cst_23 {dimension_numbers = #tpu.dot_dimension_numbers<[1], [0], [0], [1], [0, 0, 1, 1], [], []>} : vector<48x16xf32>, vector<16x128xf32>, vector<48x128xf32> -> vector<48x128xf32>
    %c2 = arith.constant 2 : index
    %c0_24 = arith.constant 0 : index
    %c0_25 = arith.constant 0 : index
    %70 = vector.load %arg1[%c2, %c0_24, %c0_25] : memref<8x48x128xf32, #tpu.memory_space<vmem>>, vector<1x48x128xf32>
    %71 = vector.shape_cast %70 : vector<1x48x128xf32> to vector<48x128xf32>
    %72 = vector.extract_strided_slice %71 {offsets = [0, 0], sizes = [16, 128], strides = [1, 1]} : vector<48x128xf32> to vector<16x128xf32>
    %73 = vector.extract_strided_slice %69 {offsets = [0, 0], sizes = [16, 128], strides = [1, 1]} : vector<48x128xf32> to vector<16x128xf32>
    %74 = arith.addf %72, %73 : vector<16x128xf32>
    %75 = arith.negf %74 : vector<16x128xf32>
    %76 = math.exp %75 : vector<16x128xf32>
    %cst_26 = arith.constant 1.000000e+00 : f32
    %77 = vector.broadcast %cst_26 : f32 to vector<16x128xf32>
    %78 = arith.addf %77, %76 : vector<16x128xf32>
    %79 = arith.divf %77, %78 : vector<16x128xf32>
    %80 = vector.extract_strided_slice %71 {offsets = [16, 0], sizes = [16, 128], strides = [1, 1]} : vector<48x128xf32> to vector<16x128xf32>
    %81 = vector.extract_strided_slice %69 {offsets = [16, 0], sizes = [16, 128], strides = [1, 1]} : vector<48x128xf32> to vector<16x128xf32>
    %82 = arith.addf %80, %81 : vector<16x128xf32>
    %83 = arith.negf %82 : vector<16x128xf32>
    %84 = math.exp %83 : vector<16x128xf32>
    %cst_27 = arith.constant 1.000000e+00 : f32
    %85 = vector.broadcast %cst_27 : f32 to vector<16x128xf32>
    %86 = arith.addf %85, %84 : vector<16x128xf32>
    %87 = arith.divf %85, %86 : vector<16x128xf32>
    %88 = vector.extract_strided_slice %71 {offsets = [32, 0], sizes = [16, 128], strides = [1, 1]} : vector<48x128xf32> to vector<16x128xf32>
    %89 = vector.extract_strided_slice %69 {offsets = [32, 0], sizes = [16, 128], strides = [1, 1]} : vector<48x128xf32> to vector<16x128xf32>
    %90 = arith.addf %89, %1 : vector<16x128xf32>
    %91 = arith.mulf %79, %90 : vector<16x128xf32>
    %92 = arith.addf %88, %91 : vector<16x128xf32>
    %93 = math.tanh %92 : vector<16x128xf32>
    %cst_28 = arith.constant 1.000000e+00 : f32
    %94 = vector.broadcast %cst_28 : f32 to vector<16x128xf32>
    %95 = arith.subf %94, %87 : vector<16x128xf32>
    %96 = arith.mulf %95, %93 : vector<16x128xf32>
    %97 = arith.mulf %87, %60 : vector<16x128xf32>
    %98 = arith.addf %96, %97 : vector<16x128xf32>
    %99 = vector.extract_strided_slice %98 {offsets = [0, 0], sizes = [8, 128], strides = [1, 1]} : vector<16x128xf32> to vector<8x128xf32>
    %c2_29 = arith.constant 2 : index
    %c0_30 = arith.constant 0 : index
    %c0_31 = arith.constant 0 : index
    %100 = vector.load %arg4[%c2_29, %c0_30, %c0_31] : memref<8x16x128xf32, #tpu.memory_space<vmem>>, vector<1x8x128xf32>
    %101 = vector.shape_cast %100 : vector<1x8x128xf32> to vector<8x128xf32>
    %102 = vector.shape_cast %99 : vector<8x128xf32> to vector<1x8x128xf32>
    tpu.vector_store %arg4[%c2_29, %c0_30, %c0_31], %102 {strides = array<i32>} : memref<8x16x128xf32, #tpu.memory_space<vmem>>, vector<1x8x128xf32>,
    %103 = vector.extract_strided_slice %98 {offsets = [8, 0], sizes = [8, 128], strides = [1, 1]} : vector<16x128xf32> to vector<8x128xf32>
    %c5 = arith.constant 5 : index
    %c8_32 = arith.constant 8 : index
    %c0_33 = arith.constant 0 : index
    %104 = vector.load %arg4[%c5, %c8_32, %c0_33] : memref<8x16x128xf32, #tpu.memory_space<vmem>>, vector<1x8x128xf32>
    %105 = vector.shape_cast %104 : vector<1x8x128xf32> to vector<8x128xf32>
    %106 = vector.shape_cast %103 : vector<8x128xf32> to vector<1x8x128xf32>
    tpu.vector_store %arg4[%c5, %c8_32, %c0_33], %106 {strides = array<i32>} : memref<8x16x128xf32, #tpu.memory_space<vmem>>, vector<1x8x128xf32>,
    %cst_34 = arith.constant dense<0.000000e+00> : vector<48x128xf32>
    %107 = tpu.matmul %0, %98, %cst_34 {dimension_numbers = #tpu.dot_dimension_numbers<[1], [0], [0], [1], [0, 0, 1, 1], [], []>} : vector<48x16xf32>, vector<16x128xf32>, vector<48x128xf32> -> vector<48x128xf32>
    %c3 = arith.constant 3 : index
    %c0_35 = arith.constant 0 : index
    %c0_36 = arith.constant 0 : index
    %108 = vector.load %arg1[%c3, %c0_35, %c0_36] : memref<8x48x128xf32, #tpu.memory_space<vmem>>, vector<1x48x128xf32>
    %109 = vector.shape_cast %108 : vector<1x48x128xf32> to vector<48x128xf32>
    %110 = vector.extract_strided_slice %109 {offsets = [0, 0], sizes = [16, 128], strides = [1, 1]} : vector<48x128xf32> to vector<16x128xf32>
    %111 = vector.extract_strided_slice %107 {offsets = [0, 0], sizes = [16, 128], strides = [1, 1]} : vector<48x128xf32> to vector<16x128xf32>
    %112 = arith.addf %110, %111 : vector<16x128xf32>
    %113 = arith.negf %112 : vector<16x128xf32>
    %114 = math.exp %113 : vector<16x128xf32>
    %cst_37 = arith.constant 1.000000e+00 : f32
    %115 = vector.broadcast %cst_37 : f32 to vector<16x128xf32>
    %116 = arith.addf %115, %114 : vector<16x128xf32>
    %117 = arith.divf %115, %116 : vector<16x128xf32>
    %118 = vector.extract_strided_slice %109 {offsets = [16, 0], sizes = [16, 128], strides = [1, 1]} : vector<48x128xf32> to vector<16x128xf32>
    %119 = vector.extract_strided_slice %107 {offsets = [16, 0], sizes = [16, 128], strides = [1, 1]} : vector<48x128xf32> to vector<16x128xf32>
    %120 = arith.addf %118, %119 : vector<16x128xf32>
    %121 = arith.negf %120 : vector<16x128xf32>
    %122 = math.exp %121 : vector<16x128xf32>
    %cst_38 = arith.constant 1.000000e+00 : f32
    %123 = vector.broadcast %cst_38 : f32 to vector<16x128xf32>
    %124 = arith.addf %123, %122 : vector<16x128xf32>
    %125 = arith.divf %123, %124 : vector<16x128xf32>
    %126 = vector.extract_strided_slice %109 {offsets = [32, 0], sizes = [16, 128], strides = [1, 1]} : vector<48x128xf32> to vector<16x128xf32>
    %127 = vector.extract_strided_slice %107 {offsets = [32, 0], sizes = [16, 128], strides = [1, 1]} : vector<48x128xf32> to vector<16x128xf32>
    %128 = arith.addf %127, %1 : vector<16x128xf32>
    %129 = arith.mulf %117, %128 : vector<16x128xf32>
    %130 = arith.addf %126, %129 : vector<16x128xf32>
    %131 = math.tanh %130 : vector<16x128xf32>
    %cst_39 = arith.constant 1.000000e+00 : f32
    %132 = vector.broadcast %cst_39 : f32 to vector<16x128xf32>
    %133 = arith.subf %132, %125 : vector<16x128xf32>
    %134 = arith.mulf %133, %131 : vector<16x128xf32>
    %135 = arith.mulf %125, %98 : vector<16x128xf32>
    %136 = arith.addf %134, %135 : vector<16x128xf32>
    %137 = vector.extract_strided_slice %136 {offsets = [0, 0], sizes = [8, 128], strides = [1, 1]} : vector<16x128xf32> to vector<8x128xf32>
    %c3_40 = arith.constant 3 : index
    %c0_41 = arith.constant 0 : index
    %c0_42 = arith.constant 0 : index
    %138 = vector.load %arg4[%c3_40, %c0_41, %c0_42] : memref<8x16x128xf32, #tpu.memory_space<vmem>>, vector<1x8x128xf32>
    %139 = vector.shape_cast %138 : vector<1x8x128xf32> to vector<8x128xf32>
    %140 = vector.shape_cast %137 : vector<8x128xf32> to vector<1x8x128xf32>
    tpu.vector_store %arg4[%c3_40, %c0_41, %c0_42], %140 {strides = array<i32>} : memref<8x16x128xf32, #tpu.memory_space<vmem>>, vector<1x8x128xf32>,
    %141 = vector.extract_strided_slice %136 {offsets = [8, 0], sizes = [8, 128], strides = [1, 1]} : vector<16x128xf32> to vector<8x128xf32>
    %c4 = arith.constant 4 : index
    %c8_43 = arith.constant 8 : index
    %c0_44 = arith.constant 0 : index
    %142 = vector.load %arg4[%c4, %c8_43, %c0_44] : memref<8x16x128xf32, #tpu.memory_space<vmem>>, vector<1x8x128xf32>
    %143 = vector.shape_cast %142 : vector<1x8x128xf32> to vector<8x128xf32>
    %144 = vector.shape_cast %141 : vector<8x128xf32> to vector<1x8x128xf32>
    tpu.vector_store %arg4[%c4, %c8_43, %c0_44], %144 {strides = array<i32>} : memref<8x16x128xf32, #tpu.memory_space<vmem>>, vector<1x8x128xf32>,
    %cst_45 = arith.constant dense<0.000000e+00> : vector<48x128xf32>
    %145 = tpu.matmul %0, %136, %cst_45 {dimension_numbers = #tpu.dot_dimension_numbers<[1], [0], [0], [1], [0, 0, 1, 1], [], []>} : vector<48x16xf32>, vector<16x128xf32>, vector<48x128xf32> -> vector<48x128xf32>
    %c4_46 = arith.constant 4 : index
    %c0_47 = arith.constant 0 : index
    %c0_48 = arith.constant 0 : index
    %146 = vector.load %arg1[%c4_46, %c0_47, %c0_48] : memref<8x48x128xf32, #tpu.memory_space<vmem>>, vector<1x48x128xf32>
    %147 = vector.shape_cast %146 : vector<1x48x128xf32> to vector<48x128xf32>
    %148 = vector.extract_strided_slice %147 {offsets = [0, 0], sizes = [16, 128], strides = [1, 1]} : vector<48x128xf32> to vector<16x128xf32>
    %149 = vector.extract_strided_slice %145 {offsets = [0, 0], sizes = [16, 128], strides = [1, 1]} : vector<48x128xf32> to vector<16x128xf32>
    %150 = arith.addf %148, %149 : vector<16x128xf32>
    %151 = arith.negf %150 : vector<16x128xf32>
    %152 = math.exp %151 : vector<16x128xf32>
    %cst_49 = arith.constant 1.000000e+00 : f32
    %153 = vector.broadcast %cst_49 : f32 to vector<16x128xf32>
    %154 = arith.addf %153, %152 : vector<16x128xf32>
    %155 = arith.divf %153, %154 : vector<16x128xf32>
    %156 = vector.extract_strided_slice %147 {offsets = [16, 0], sizes = [16, 128], strides = [1, 1]} : vector<48x128xf32> to vector<16x128xf32>
    %157 = vector.extract_strided_slice %145 {offsets = [16, 0], sizes = [16, 128], strides = [1, 1]} : vector<48x128xf32> to vector<16x128xf32>
    %158 = arith.addf %156, %157 : vector<16x128xf32>
    %159 = arith.negf %158 : vector<16x128xf32>
    %160 = math.exp %159 : vector<16x128xf32>
    %cst_50 = arith.constant 1.000000e+00 : f32
    %161 = vector.broadcast %cst_50 : f32 to vector<16x128xf32>
    %162 = arith.addf %161, %160 : vector<16x128xf32>
    %163 = arith.divf %161, %162 : vector<16x128xf32>
    %164 = vector.extract_strided_slice %147 {offsets = [32, 0], sizes = [16, 128], strides = [1, 1]} : vector<48x128xf32> to vector<16x128xf32>
    %165 = vector.extract_strided_slice %145 {offsets = [32, 0], sizes = [16, 128], strides = [1, 1]} : vector<48x128xf32> to vector<16x128xf32>
    %166 = arith.addf %165, %1 : vector<16x128xf32>
    %167 = arith.mulf %155, %166 : vector<16x128xf32>
    %168 = arith.addf %164, %167 : vector<16x128xf32>
    %169 = math.tanh %168 : vector<16x128xf32>
    %cst_51 = arith.constant 1.000000e+00 : f32
    %170 = vector.broadcast %cst_51 : f32 to vector<16x128xf32>
    %171 = arith.subf %170, %163 : vector<16x128xf32>
    %172 = arith.mulf %171, %169 : vector<16x128xf32>
    %173 = arith.mulf %163, %136 : vector<16x128xf32>
    %174 = arith.addf %172, %173 : vector<16x128xf32>
    %175 = vector.extract_strided_slice %174 {offsets = [0, 0], sizes = [8, 128], strides = [1, 1]} : vector<16x128xf32> to vector<8x128xf32>
    %c4_52 = arith.constant 4 : index
    %c0_53 = arith.constant 0 : index
    %c0_54 = arith.constant 0 : index
    %176 = vector.load %arg4[%c4_52, %c0_53, %c0_54] : memref<8x16x128xf32, #tpu.memory_space<vmem>>, vector<1x8x128xf32>
    %177 = vector.shape_cast %176 : vector<1x8x128xf32> to vector<8x128xf32>
    %178 = vector.shape_cast %175 : vector<8x128xf32> to vector<1x8x128xf32>
    tpu.vector_store %arg4[%c4_52, %c0_53, %c0_54], %178 {strides = array<i32>} : memref<8x16x128xf32, #tpu.memory_space<vmem>>, vector<1x8x128xf32>,
    %179 = vector.extract_strided_slice %174 {offsets = [8, 0], sizes = [8, 128], strides = [1, 1]} : vector<16x128xf32> to vector<8x128xf32>
    %c3_55 = arith.constant 3 : index
    %c8_56 = arith.constant 8 : index
    %c0_57 = arith.constant 0 : index
    %180 = vector.load %arg4[%c3_55, %c8_56, %c0_57] : memref<8x16x128xf32, #tpu.memory_space<vmem>>, vector<1x8x128xf32>
    %181 = vector.shape_cast %180 : vector<1x8x128xf32> to vector<8x128xf32>
    %182 = vector.shape_cast %179 : vector<8x128xf32> to vector<1x8x128xf32>
    tpu.vector_store %arg4[%c3_55, %c8_56, %c0_57], %182 {strides = array<i32>} : memref<8x16x128xf32, #tpu.memory_space<vmem>>, vector<1x8x128xf32>,
    %cst_58 = arith.constant dense<0.000000e+00> : vector<48x128xf32>
    %183 = tpu.matmul %0, %174, %cst_58 {dimension_numbers = #tpu.dot_dimension_numbers<[1], [0], [0], [1], [0, 0, 1, 1], [], []>} : vector<48x16xf32>, vector<16x128xf32>, vector<48x128xf32> -> vector<48x128xf32>
    %c5_59 = arith.constant 5 : index
    %c0_60 = arith.constant 0 : index
    %c0_61 = arith.constant 0 : index
    %184 = vector.load %arg1[%c5_59, %c0_60, %c0_61] : memref<8x48x128xf32, #tpu.memory_space<vmem>>, vector<1x48x128xf32>
    %185 = vector.shape_cast %184 : vector<1x48x128xf32> to vector<48x128xf32>
    %186 = vector.extract_strided_slice %185 {offsets = [0, 0], sizes = [16, 128], strides = [1, 1]} : vector<48x128xf32> to vector<16x128xf32>
    %187 = vector.extract_strided_slice %183 {offsets = [0, 0], sizes = [16, 128], strides = [1, 1]} : vector<48x128xf32> to vector<16x128xf32>
    %188 = arith.addf %186, %187 : vector<16x128xf32>
    %189 = arith.negf %188 : vector<16x128xf32>
    %190 = math.exp %189 : vector<16x128xf32>
    %cst_62 = arith.constant 1.000000e+00 : f32
    %191 = vector.broadcast %cst_62 : f32 to vector<16x128xf32>
    %192 = arith.addf %191, %190 : vector<16x128xf32>
    %193 = arith.divf %191, %192 : vector<16x128xf32>
    %194 = vector.extract_strided_slice %185 {offsets = [16, 0], sizes = [16, 128], strides = [1, 1]} : vector<48x128xf32> to vector<16x128xf32>
    %195 = vector.extract_strided_slice %183 {offsets = [16, 0], sizes = [16, 128], strides = [1, 1]} : vector<48x128xf32> to vector<16x128xf32>
    %196 = arith.addf %194, %195 : vector<16x128xf32>
    %197 = arith.negf %196 : vector<16x128xf32>
    %198 = math.exp %197 : vector<16x128xf32>
    %cst_63 = arith.constant 1.000000e+00 : f32
    %199 = vector.broadcast %cst_63 : f32 to vector<16x128xf32>
    %200 = arith.addf %199, %198 : vector<16x128xf32>
    %201 = arith.divf %199, %200 : vector<16x128xf32>
    %202 = vector.extract_strided_slice %185 {offsets = [32, 0], sizes = [16, 128], strides = [1, 1]} : vector<48x128xf32> to vector<16x128xf32>
    %203 = vector.extract_strided_slice %183 {offsets = [32, 0], sizes = [16, 128], strides = [1, 1]} : vector<48x128xf32> to vector<16x128xf32>
    %204 = arith.addf %203, %1 : vector<16x128xf32>
    %205 = arith.mulf %193, %204 : vector<16x128xf32>
    %206 = arith.addf %202, %205 : vector<16x128xf32>
    %207 = math.tanh %206 : vector<16x128xf32>
    %cst_64 = arith.constant 1.000000e+00 : f32
    %208 = vector.broadcast %cst_64 : f32 to vector<16x128xf32>
    %209 = arith.subf %208, %201 : vector<16x128xf32>
    %210 = arith.mulf %209, %207 : vector<16x128xf32>
    %211 = arith.mulf %201, %174 : vector<16x128xf32>
    %212 = arith.addf %210, %211 : vector<16x128xf32>
    %213 = vector.extract_strided_slice %212 {offsets = [0, 0], sizes = [8, 128], strides = [1, 1]} : vector<16x128xf32> to vector<8x128xf32>
    %c5_65 = arith.constant 5 : index
    %c0_66 = arith.constant 0 : index
    %c0_67 = arith.constant 0 : index
    %214 = vector.load %arg4[%c5_65, %c0_66, %c0_67] : memref<8x16x128xf32, #tpu.memory_space<vmem>>, vector<1x8x128xf32>
    %215 = vector.shape_cast %214 : vector<1x8x128xf32> to vector<8x128xf32>
    %216 = vector.shape_cast %213 : vector<8x128xf32> to vector<1x8x128xf32>
    tpu.vector_store %arg4[%c5_65, %c0_66, %c0_67], %216 {strides = array<i32>} : memref<8x16x128xf32, #tpu.memory_space<vmem>>, vector<1x8x128xf32>,
    %217 = vector.extract_strided_slice %212 {offsets = [8, 0], sizes = [8, 128], strides = [1, 1]} : vector<16x128xf32> to vector<8x128xf32>
    %c2_68 = arith.constant 2 : index
    %c8_69 = arith.constant 8 : index
    %c0_70 = arith.constant 0 : index
    %218 = vector.load %arg4[%c2_68, %c8_69, %c0_70] : memref<8x16x128xf32, #tpu.memory_space<vmem>>, vector<1x8x128xf32>
    %219 = vector.shape_cast %218 : vector<1x8x128xf32> to vector<8x128xf32>
    %220 = vector.shape_cast %217 : vector<8x128xf32> to vector<1x8x128xf32>
    tpu.vector_store %arg4[%c2_68, %c8_69, %c0_70], %220 {strides = array<i32>} : memref<8x16x128xf32, #tpu.memory_space<vmem>>, vector<1x8x128xf32>,
    %cst_71 = arith.constant dense<0.000000e+00> : vector<48x128xf32>
    %221 = tpu.matmul %0, %212, %cst_71 {dimension_numbers = #tpu.dot_dimension_numbers<[1], [0], [0], [1], [0, 0, 1, 1], [], []>} : vector<48x16xf32>, vector<16x128xf32>, vector<48x128xf32> -> vector<48x128xf32>
    %c6_72 = arith.constant 6 : index
    %c0_73 = arith.constant 0 : index
    %c0_74 = arith.constant 0 : index
    %222 = vector.load %arg1[%c6_72, %c0_73, %c0_74] : memref<8x48x128xf32, #tpu.memory_space<vmem>>, vector<1x48x128xf32>
    %223 = vector.shape_cast %222 : vector<1x48x128xf32> to vector<48x128xf32>
    %224 = vector.extract_strided_slice %223 {offsets = [0, 0], sizes = [16, 128], strides = [1, 1]} : vector<48x128xf32> to vector<16x128xf32>
    %225 = vector.extract_strided_slice %221 {offsets = [0, 0], sizes = [16, 128], strides = [1, 1]} : vector<48x128xf32> to vector<16x128xf32>
    %226 = arith.addf %224, %225 : vector<16x128xf32>
    %227 = arith.negf %226 : vector<16x128xf32>
    %228 = math.exp %227 : vector<16x128xf32>
    %cst_75 = arith.constant 1.000000e+00 : f32
    %229 = vector.broadcast %cst_75 : f32 to vector<16x128xf32>
    %230 = arith.addf %229, %228 : vector<16x128xf32>
    %231 = arith.divf %229, %230 : vector<16x128xf32>
    %232 = vector.extract_strided_slice %223 {offsets = [16, 0], sizes = [16, 128], strides = [1, 1]} : vector<48x128xf32> to vector<16x128xf32>
    %233 = vector.extract_strided_slice %221 {offsets = [16, 0], sizes = [16, 128], strides = [1, 1]} : vector<48x128xf32> to vector<16x128xf32>
    %234 = arith.addf %232, %233 : vector<16x128xf32>
    %235 = arith.negf %234 : vector<16x128xf32>
    %236 = math.exp %235 : vector<16x128xf32>
    %cst_76 = arith.constant 1.000000e+00 : f32
    %237 = vector.broadcast %cst_76 : f32 to vector<16x128xf32>
    %238 = arith.addf %237, %236 : vector<16x128xf32>
    %239 = arith.divf %237, %238 : vector<16x128xf32>
    %240 = vector.extract_strided_slice %223 {offsets = [32, 0], sizes = [16, 128], strides = [1, 1]} : vector<48x128xf32> to vector<16x128xf32>
    %241 = vector.extract_strided_slice %221 {offsets = [32, 0], sizes = [16, 128], strides = [1, 1]} : vector<48x128xf32> to vector<16x128xf32>
    %242 = arith.addf %241, %1 : vector<16x128xf32>
    %243 = arith.mulf %231, %242 : vector<16x128xf32>
    %244 = arith.addf %240, %243 : vector<16x128xf32>
    %245 = math.tanh %244 : vector<16x128xf32>
    %cst_77 = arith.constant 1.000000e+00 : f32
    %246 = vector.broadcast %cst_77 : f32 to vector<16x128xf32>
    %247 = arith.subf %246, %239 : vector<16x128xf32>
    %248 = arith.mulf %247, %245 : vector<16x128xf32>
    %249 = arith.mulf %239, %212 : vector<16x128xf32>
    %250 = arith.addf %248, %249 : vector<16x128xf32>
    %251 = vector.extract_strided_slice %250 {offsets = [0, 0], sizes = [8, 128], strides = [1, 1]} : vector<16x128xf32> to vector<8x128xf32>
    %c6_78 = arith.constant 6 : index
    %c0_79 = arith.constant 0 : index
    %c0_80 = arith.constant 0 : index
    %252 = vector.load %arg4[%c6_78, %c0_79, %c0_80] : memref<8x16x128xf32, #tpu.memory_space<vmem>>, vector<1x8x128xf32>
    %253 = vector.shape_cast %252 : vector<1x8x128xf32> to vector<8x128xf32>
    %254 = vector.shape_cast %251 : vector<8x128xf32> to vector<1x8x128xf32>
    tpu.vector_store %arg4[%c6_78, %c0_79, %c0_80], %254 {strides = array<i32>} : memref<8x16x128xf32, #tpu.memory_space<vmem>>, vector<1x8x128xf32>,
    %255 = vector.extract_strided_slice %250 {offsets = [8, 0], sizes = [8, 128], strides = [1, 1]} : vector<16x128xf32> to vector<8x128xf32>
    %c1_81 = arith.constant 1 : index
    %c8_82 = arith.constant 8 : index
    %c0_83 = arith.constant 0 : index
    %256 = vector.load %arg4[%c1_81, %c8_82, %c0_83] : memref<8x16x128xf32, #tpu.memory_space<vmem>>, vector<1x8x128xf32>
    %257 = vector.shape_cast %256 : vector<1x8x128xf32> to vector<8x128xf32>
    %258 = vector.shape_cast %255 : vector<8x128xf32> to vector<1x8x128xf32>
    tpu.vector_store %arg4[%c1_81, %c8_82, %c0_83], %258 {strides = array<i32>} : memref<8x16x128xf32, #tpu.memory_space<vmem>>, vector<1x8x128xf32>,
    %cst_84 = arith.constant dense<0.000000e+00> : vector<48x128xf32>
    %259 = tpu.matmul %0, %250, %cst_84 {dimension_numbers = #tpu.dot_dimension_numbers<[1], [0], [0], [1], [0, 0, 1, 1], [], []>} : vector<48x16xf32>, vector<16x128xf32>, vector<48x128xf32> -> vector<48x128xf32>
    %c7_85 = arith.constant 7 : index
    %c0_86 = arith.constant 0 : index
    %c0_87 = arith.constant 0 : index
    %260 = vector.load %arg1[%c7_85, %c0_86, %c0_87] : memref<8x48x128xf32, #tpu.memory_space<vmem>>, vector<1x48x128xf32>
    %261 = vector.shape_cast %260 : vector<1x48x128xf32> to vector<48x128xf32>
    %262 = vector.extract_strided_slice %261 {offsets = [0, 0], sizes = [16, 128], strides = [1, 1]} : vector<48x128xf32> to vector<16x128xf32>
    %263 = vector.extract_strided_slice %259 {offsets = [0, 0], sizes = [16, 128], strides = [1, 1]} : vector<48x128xf32> to vector<16x128xf32>
    %264 = arith.addf %262, %263 : vector<16x128xf32>
    %265 = arith.negf %264 : vector<16x128xf32>
    %266 = math.exp %265 : vector<16x128xf32>
    %cst_88 = arith.constant 1.000000e+00 : f32
    %267 = vector.broadcast %cst_88 : f32 to vector<16x128xf32>
    %268 = arith.addf %267, %266 : vector<16x128xf32>
    %269 = arith.divf %267, %268 : vector<16x128xf32>
    %270 = vector.extract_strided_slice %261 {offsets = [16, 0], sizes = [16, 128], strides = [1, 1]} : vector<48x128xf32> to vector<16x128xf32>
    %271 = vector.extract_strided_slice %259 {offsets = [16, 0], sizes = [16, 128], strides = [1, 1]} : vector<48x128xf32> to vector<16x128xf32>
    %272 = arith.addf %270, %271 : vector<16x128xf32>
    %273 = arith.negf %272 : vector<16x128xf32>
    %274 = math.exp %273 : vector<16x128xf32>
    %cst_89 = arith.constant 1.000000e+00 : f32
    %275 = vector.broadcast %cst_89 : f32 to vector<16x128xf32>
    %276 = arith.addf %275, %274 : vector<16x128xf32>
    %277 = arith.divf %275, %276 : vector<16x128xf32>
    %278 = vector.extract_strided_slice %261 {offsets = [32, 0], sizes = [16, 128], strides = [1, 1]} : vector<48x128xf32> to vector<16x128xf32>
    %279 = vector.extract_strided_slice %259 {offsets = [32, 0], sizes = [16, 128], strides = [1, 1]} : vector<48x128xf32> to vector<16x128xf32>
    %280 = arith.addf %279, %1 : vector<16x128xf32>
    %281 = arith.mulf %269, %280 : vector<16x128xf32>
    %282 = arith.addf %278, %281 : vector<16x128xf32>
    %283 = math.tanh %282 : vector<16x128xf32>
    %cst_90 = arith.constant 1.000000e+00 : f32
    %284 = vector.broadcast %cst_90 : f32 to vector<16x128xf32>
    %285 = arith.subf %284, %277 : vector<16x128xf32>
    %286 = arith.mulf %285, %283 : vector<16x128xf32>
    %287 = arith.mulf %277, %250 : vector<16x128xf32>
    %288 = arith.addf %286, %287 : vector<16x128xf32>
    %289 = vector.extract_strided_slice %288 {offsets = [0, 0], sizes = [8, 128], strides = [1, 1]} : vector<16x128xf32> to vector<8x128xf32>
    %c7_91 = arith.constant 7 : index
    %c0_92 = arith.constant 0 : index
    %c0_93 = arith.constant 0 : index
    %290 = vector.load %arg4[%c7_91, %c0_92, %c0_93] : memref<8x16x128xf32, #tpu.memory_space<vmem>>, vector<1x8x128xf32>
    %291 = vector.shape_cast %290 : vector<1x8x128xf32> to vector<8x128xf32>
    %292 = vector.shape_cast %289 : vector<8x128xf32> to vector<1x8x128xf32>
    tpu.vector_store %arg4[%c7_91, %c0_92, %c0_93], %292 {strides = array<i32>} : memref<8x16x128xf32, #tpu.memory_space<vmem>>, vector<1x8x128xf32>,
    %293 = vector.extract_strided_slice %288 {offsets = [8, 0], sizes = [8, 128], strides = [1, 1]} : vector<16x128xf32> to vector<8x128xf32>
    %c0_94 = arith.constant 0 : index
    %c8_95 = arith.constant 8 : index
    %c0_96 = arith.constant 0 : index
    %294 = vector.load %arg4[%c0_94, %c8_95, %c0_96] : memref<8x16x128xf32, #tpu.memory_space<vmem>>, vector<1x8x128xf32>
    %295 = vector.shape_cast %294 : vector<1x8x128xf32> to vector<8x128xf32>
    %296 = vector.shape_cast %293 : vector<8x128xf32> to vector<1x8x128xf32>
    tpu.vector_store %arg4[%c0_94, %c8_95, %c0_96], %296 {strides = array<i32>} : memref<8x16x128xf32, #tpu.memory_space<vmem>>, vector<1x8x128xf32>,
    return
  }
  func.func @transform_0(%arg0: i32) -> (i32, i32, i32) {
    %c0_i32 = arith.constant 0 : i32
    %c0_i32_0 = arith.constant 0 : i32
    %c0_i32_1 = arith.constant 0 : i32
    return %c0_i32, %c0_i32_0, %arg0 : i32, i32, i32
  }
  func.func @transform_1(%arg0: i32) -> (i32, i32) {
    %c0_i32 = arith.constant 0 : i32
    %c0_i32_0 = arith.constant 0 : i32
    %c0_i32_1 = arith.constant 0 : i32
    return %c0_i32, %c0_i32_0 : i32, i32
  }
  func.func @transform_2(%arg0: i32) -> (i32, i32) {
    %c0_i32 = arith.constant 0 : i32
    %c0_i32_0 = arith.constant 0 : i32
    return %c0_i32, %arg0 : i32, i32
  }
  func.func @transform_3(%arg0: i32) -> (i32, i32, i32) {
    %c0_i32 = arith.constant 0 : i32
    %c0_i32_0 = arith.constant 0 : i32
    %c0_i32_1 = arith.constant 0 : i32
    return %c0_i32, %c0_i32_0, %arg0 : i32, i32, i32
  }
}

</mosaic_0001>

<llo_original>
// kernel: renet_forward.2
$region0: #{renet_forward.2}
  #allocation0 [shape = 'u32[]', space=smem, size = 0x4, offset = 0x4, fixed_abs, tag = 'smem constant byte address 0x4 - core index']
  #allocation1 [shape = 'u32[144,128]{1,0:T(1,128)}', space=vmem, size = 0x12000, scoped, tag = 'internal scratch']
  %s0 = inlined_call_operand.vmem [shape: f32[8,48,128], index: 0, kind: input, shape index: {}]
  %s1 = inlined_call_operand.vmem [shape: f32[48,16], index: 1, kind: input, shape index: {}]
  %s2 = inlined_call_operand.vmem [shape: f32[16,128], index: 2, kind: input, shape index: {}]
  %s3 = inlined_call_operand.vmem [shape: f32[8,16,128], index: 3, kind: output, shape index: {}]
  %s4 = sld [smem:[#allocation0]]
  $region22: #{renet_forward.2} parent=0
    _
  %s6 = ssub.s32 1, %s4
  %s7 = scalar_select 0, %s6, %s4
  // Predicated region
  $region2: #{renet_forward.2} parent=0 // pred_check
    _
  $region3: #{renet_forward.2} parent=0 // pred_check_branch
    %9 = sbr.rel (0) target = $region5
  $region4: #{renet_forward.2} parent=0 // pred_region
    _
  $region5: #{renet_forward.2} parent=0 // pred_fallthru
    _
  // Predicated region
  $region6: #{renet_forward.2} parent=0 // pred_check
    _
  $region7: #{renet_forward.2} parent=0 // pred_check_branch
    %11 = sbr.rel (0) target = $region9
  $region8: #{renet_forward.2} parent=0 // pred_region
    _
  $region9: #{renet_forward.2} parent=0 // pred_fallthru
    _
  // Predicated region
  $region10: #{renet_forward.2} parent=0 // pred_check
    _
  $region11: #{renet_forward.2} parent=0 // pred_check_branch
    %13 = sbr.rel (0) target = $region13
  $region12: #{renet_forward.2} parent=0 // pred_region
    _
  $region13: #{renet_forward.2} parent=0 // pred_fallthru
    _
  %v14 = vld [vmem:[%s1] sm:$0xff]
  %v15 = vld [vmem:[%s1 + $0x8] sm:$0xff]
  %v16 = vld [vmem:[%s1 + $0x10] sm:$0xff]
  %v17 = vld [vmem:[%s1 + $0x18] sm:$0xff]
  %v18 = vld [vmem:[%s1 + $0x20] sm:$0xff]
  %v19 = vld [vmem:[%s1 + $0x28] sm:$0xff]
  %v20 = vld [vmem:[%s2] sm:$0xff]
  %v21 = vld [vmem:[%s2 + $0x8] sm:$0xff]
  %v22 = vld [vmem:[%s0] sm:$0xff]
  %v23 = vld [vmem:[%s0 + $0x8] sm:$0xff]
  %v24 = vld [vmem:[%s0 + $0x10] sm:$0xff]
  %v25 = vld [vmem:[%s0 + $0x18] sm:$0xff]
  %v26 = vld [vmem:[%s0 + $0x20] sm:$0xff]
  %v27 = vld [vmem:[%s0 + $0x28] sm:$0xff]
  %v28 = vxor.u32 %v22, 2147483648
  %v29 = vxor.u32 %v23, 2147483648
  %v30 = vmul.f32 %v28, 1.442695
  %v31 = vpow.pop %v30
  %v32 = vmul.f32 %v29, 1.442695
  %v33 = vpow.pop %v32
  %v34 = vadd.f32 %v31, 1.0
  %v35 = vadd.f32 %v33, 1.0
  %v36 = vrcp.pop %v34
  %v37 = vmul.f32 1.0, %v36
  %v38 = vrcp.pop %v35
  %v39 = vmul.f32 1.0, %v38
  %v40 = vxor.u32 %v24, 2147483648
  %v41 = vxor.u32 %v25, 2147483648
  %v42 = vmul.f32 %v40, 1.442695
  %v43 = vpow.pop %v42
  %v44 = vmul.f32 %v41, 1.442695
  %v45 = vpow.pop %v44
  %v46 = vadd.f32 %v43, 1.0
  %v47 = vadd.f32 %v45, 1.0
  %v48 = vrcp.pop %v46
  %v49 = vmul.f32 1.0, %v48
  %v50 = vrcp.pop %v47
  %v51 = vmul.f32 1.0, %v50
  %v52 = vmul.f32 %v37, %v20
  %v53 = vmul.f32 %v39, %v21
  %v54 = vadd.f32 %v26, %v52
  %v55 = vadd.f32 %v27, %v53
  %v56 = vtanh.pop %v54
  %v57 = vtanh.pop %v55
  %v58 = vsub.f32 1.0, %v49
  %v59 = vsub.f32 1.0, %v51
  %v60 = vmul.f32 %v58, %v56
  %v61 = vmul.f32 %v59, %v57
  %62 = vst [vmem:[%s3] sm:$0xff] %v60
  %s63 = scalar_lea.vmem %s3, 112
  %64 = vst [vmem:[%s63 + $0x8] sm:$0xff] %v61
  %vm65 = vcmask 130048
  %v67 = vsel %vm65, %v14, 0
  %v70 = vsel %vm65, %v15, 0
  %v73 = vsel %vm65, %v16, 0
  %v76 = vsel %vm65, %v17, 0
  %v79 = vsel %vm65, %v18, 0
  %v82 = vsel %vm65, %v19, 0
  %84 = vmatprep.subr.mxu0 0.0
  %85 = vmatpush1.msra.mxu0 %v60
  %86 = vmatprep.subr.mxu0 0.0
  %87 = vmatpush1.msra.mxu0 %v61
  %88 = vmatprep.subr.mxu0 0.0
  %89 = vmatpush1.msra.mxu0 0.0
  %90 = vmatprep.subr.mxu0 0.0
  %91 = vmatpush1.msra.mxu0 0.0
  %92 = vmatprep.subr.mxu0 0.0
  %93 = vmatpush1.msra.mxu0 0.0
  %94 = vmatprep.subr.mxu0 0.0
  %95 = vmatpush1.msra.mxu0 0.0
  %96 = vmatprep.subr.mxu0 0.0
  %97 = vmatpush1.msra.mxu0 0.0
  %98 = vmatprep.subr.mxu0 0.0
  %99 = vmatpush1.msra.mxu0 0.0
  %100 = vmatprep.subr.mxu0 0.0
  %101 = vmatpush1.msra.mxu0 0.0
  %102 = vmatprep.subr.mxu0 0.0
  %103 = vmatpush1.msra.mxu0 0.0
  %104 = vmatprep.subr.mxu0 0.0
  %105 = vmatpush1.msra.mxu0 0.0
  %106 = vmatprep.subr.mxu0 0.0
  %107 = vmatpush1.msra.mxu0 0.0
  %108 = vmatprep.subr.mxu0 0.0
  %109 = vmatpush1.msra.mxu0 0.0
  %110 = vmatprep.subr.mxu0 0.0
  %111 = vmatpush1.msra.mxu0 0.0
  %112 = vmatprep.subr.mxu0 0.0
  %113 = vmatpush1.msra.mxu0 0.0
  %114 = vmatprep.subr.mxu0 0.0
  %115 = vmatpush1.msra.mxu0 0.0
  %116 = vmatprep.subr.mxu0 0.0
  %117 = vmatpush1.msra.mxu0 0.0
  %118 = vmatprep.subr.mxu0 0.0
  %119 = vmatpush1.msra.mxu0 0.0
  %120 = vmatprep.subr.mxu0 0.0
  %121 = vmatpush1.msra.mxu0 0.0
  %122 = vmatprep.subr.mxu0 0.0
  %123 = vmatpush1.msra.mxu0 0.0
  %124 = vmatprep.subr.mxu0 0.0
  %125 = vmatpush1.msra.mxu0 0.0
  %126 = vmatprep.subr.mxu0 0.0
  %127 = vmatpush1.msra.mxu0 0.0
  %128 = vmatprep.subr.mxu0 0.0
  %129 = vmatpush1.msra.mxu0 0.0
  %130 = vmatprep.subr.mxu0 0.0
  %131 = vmatpush1.msra.mxu0 0.0
  %132 = vmatprep.subr.mxu0 0.0
  %133 = vmatpush1.msra.mxu0 0.0
  %134 = vmatprep.subr.mxu0 0.0
  %135 = vmatpush1.msra.mxu0 0.0
  %136 = vmatprep.subr.mxu0 0.0
  %137 = vmatpush1.msra.mxu0 0.0
  %138 = vmatprep.subr.mxu0 0.0
  %139 = vmatpush1.msra.mxu0 0.0
  %140 = vmatprep.subr.mxu0 0.0
  %141 = vmatpush1.msra.mxu0 0.0
  %142 = vmatprep.subr.mxu0 0.0
  %143 = vmatpush1.msra.mxu0 0.0
  %144 = vmatprep.subr.mxu0 0.0
  %145 = vmatpush1.msra.mxu0 0.0
  %146 = vmatprep.subr.mxu0 0.0
  %147 = vmatpush1.msra.mxu0 0.0
  %148 = vmatprep.mubr.f32.mxu0 0.0
  %149 = vmatmul.mubr.f32.gmra.mrb[0].mxu0 %v67
  %v150 = vpop.f32.mrb[0].mxu0
  %v151 = vadd.f32 0.0, %v150
  %v152 = vpop.f32.mrb[0].mxu0
  %153 = vmatprep.mubr.f32.mxu0 0.0
  %154 = vmatmul.mubr.f32.gmra.mrb[0].mxu0 %v70
  %v155 = vpop.f32.mrb[0].mxu0
  %v156 = vadd.f32 0.0, %v155
  %v157 = vpop.f32.mrb[0].mxu0
  %158 = vmatprep.mubr.f32.mxu0 0.0
  %159 = vmatmul.mubr.f32.gmra.mrb[0].mxu0 %v73
  %v160 = vpop.f32.mrb[0].mxu0
  %v161 = vadd.f32 0.0, %v160
  %v162 = vpop.f32.mrb[0].mxu0
  %163 = vmatprep.mubr.f32.mxu0 0.0
  %164 = vmatmul.mubr.f32.gmra.mrb[0].mxu0 %v76
  %v165 = vpop.f32.mrb[0].mxu0
  %v166 = vadd.f32 0.0, %v165
  %v167 = vpop.f32.mrb[0].mxu0
  %168 = vmatprep.mubr.f32.mxu0 0.0
  %169 = vmatmul.mubr.f32.gmra.mrb[0].mxu0 %v79
  %v170 = vpop.f32.mrb[0].mxu0
  %v171 = vadd.f32 0.0, %v170
  %v172 = vpop.f32.mrb[0].mxu0
  %173 = vmatprep.mubr.f32.mxu0 0.0
  %174 = vmatmul.mubr.f32.gmra.mrb[0].mxu0 %v82
  %v175 = vpop.f32.mrb[0].mxu0
  %v176 = vadd.f32 0.0, %v175
  %v177 = vpop.f32.mrb[0].mxu0
  %178 = vdwg.mxu0
  %s179 = scalar_lea.vmem %s0, 48
  %v180 = vld [vmem:[%s179] sm:$0xff]
  %v181 = vld [vmem:[%s179 + $0x8] sm:$0xff]
  %v182 = vld [vmem:[%s179 + $0x10] sm:$0xff]
  %v183 = vld [vmem:[%s179 + $0x18] sm:$0xff]
  %v184 = vld [vmem:[%s179 + $0x20] sm:$0xff]
  %v185 = vld [vmem:[%s179 + $0x28] sm:$0xff]
  %v186 = vadd.f32 %v180, %v151
  %v187 = vadd.f32 %v181, %v156
  %v188 = vxor.u32 %v186, 2147483648
  %v189 = vxor.u32 %v187, 2147483648
  %v190 = vmul.f32 %v188, 1.442695
  %v191 = vpow.pop %v190
  %v192 = vmul.f32 %v189, 1.442695
  %v193 = vpow.pop %v192
  %v194 = vadd.f32 %v191, 1.0
  %v195 = vadd.f32 %v193, 1.0
  %v196 = vrcp.pop %v194
  %v197 = vmul.f32 1.0, %v196
  %v198 = vrcp.pop %v195
  %v199 = vmul.f32 1.0, %v198
  %v200 = vadd.f32 %v182, %v161
  %v201 = vadd.f32 %v183, %v166
  %v202 = vxor.u32 %v200, 2147483648
  %v203 = vxor.u32 %v201, 2147483648
  %v204 = vmul.f32 %v202, 1.442695
  %v205 = vpow.pop %v204
  %v206 = vmul.f32 %v203, 1.442695
  %v207 = vpow.pop %v206
  %v208 = vadd.f32 %v205, 1.0
  %v209 = vadd.f32 %v207, 1.0
  %v210 = vrcp.pop %v208
  %v211 = vmul.f32 1.0, %v210
  %v212 = vrcp.pop %v209
  %v213 = vmul.f32 1.0, %v212
  %v214 = vadd.f32 %v171, %v20
  %v215 = vadd.f32 %v176, %v21
  %v216 = vmul.f32 %v197, %v214
  %v217 = vmul.f32 %v199, %v215
  %v218 = vadd.f32 %v184, %v216
  %v219 = vadd.f32 %v185, %v217
  %v220 = vtanh.pop %v218
  %v221 = vtanh.pop %v219
  %v222 = vsub.f32 1.0, %v211
  %v223 = vsub.f32 1.0, %v213
  %v224 = vmul.f32 %v222, %v220
  %v225 = vmul.f32 %v223, %v221
  %v226 = vmul.f32 %v211, %v60
  %v227 = vmul.f32 %v213, %v61
  %v228 = vadd.f32 %v224, %v226
  %v229 = vadd.f32 %v225, %v227
  %s230 = scalar_lea.vmem %s3, 16
  %231 = vst [vmem:[%s230] sm:$0xff] %v228
  %s232 = scalar_lea.vmem %s3, 96
  %233 = vst [vmem:[%s232 + $0x8] sm:$0xff] %v229
  %234 = vmatprep.subr.mxu0 0.0
  %235 = vmatpush1.msra.mxu0 %v228
  %236 = vmatprep.subr.mxu0 0.0
  %237 = vmatpush1.msra.mxu0 %v229
  %238 = vmatprep.subr.mxu0 0.0
  %239 = vmatpush1.msra.mxu0 0.0
  %240 = vmatprep.subr.mxu0 0.0
  %241 = vmatpush1.msra.mxu0 0.0
  %242 = vmatprep.subr.mxu0 0.0
  %243 = vmatpush1.msra.mxu0 0.0
  %244 = vmatprep.subr.mxu0 0.0
  %245 = vmatpush1.msra.mxu0 0.0
  %246 = vmatprep.subr.mxu0 0.0
  %247 = vmatpush1.msra.mxu0 0.0
  %248 = vmatprep.subr.mxu0 0.0
  %249 = vmatpush1.msra.mxu0 0.0
  %250 = vmatprep.subr.mxu0 0.0
  %251 = vmatpush1.msra.mxu0 0.0
  %252 = vmatprep.subr.mxu0 0.0
  %253 = vmatpush1.msra.mxu0 0.0
  %254 = vmatprep.subr.mxu0 0.0
  %255 = vmatpush1.msra.mxu0 0.0
  %256 = vmatprep.subr.mxu0 0.0
  %257 = vmatpush1.msra.mxu0 0.0
  %258 = vmatprep.subr.mxu0 0.0
  %259 = vmatpush1.msra.mxu0 0.0
  %260 = vmatprep.subr.mxu0 0.0
  %261 = vmatpush1.msra.mxu0 0.0
  %262 = vmatprep.subr.mxu0 0.0
  %263 = vmatpush1.msra.mxu0 0.0
  %264 = vmatprep.subr.mxu0 0.0
  %265 = vmatpush1.msra.mxu0 0.0
  %266 = vmatprep.subr.mxu0 0.0
  %267 = vmatpush1.msra.mxu0 0.0
  %268 = vmatprep.subr.mxu0 0.0
  %269 = vmatpush1.msra.mxu0 0.0
  %270 = vmatprep.subr.mxu0 0.0
  %271 = vmatpush1.msra.mxu0 0.0
  %272 = vmatprep.subr.mxu0 0.0
  %273 = vmatpush1.msra.mxu0 0.0
  %274 = vmatprep.subr.mxu0 0.0
  %275 = vmatpush1.msra.mxu0 0.0
  %276 = vmatprep.subr.mxu0 0.0
  %277 = vmatpush1.msra.mxu0 0.0
  %278 = vmatprep.subr.mxu0 0.0
  %279 = vmatpush1.msra.mxu0 0.0
  %280 = vmatprep.subr.mxu0 0.0
  %281 = vmatpush1.msra.mxu0 0.0
  %282 = vmatprep.subr.mxu0 0.0
  %283 = vmatpush1.msra.mxu0 0.0
  %284 = vmatprep.subr.mxu0 0.0
  %285 = vmatpush1.msra.mxu0 0.0
  %286 = vmatprep.subr.mxu0 0.0
  %287 = vmatpush1.msra.mxu0 0.0
  %288 = vmatprep.subr.mxu0 0.0
  %289 = vmatpush1.msra.mxu0 0.0
  %290 = vmatprep.subr.mxu0 0.0
  %291 = vmatpush1.msra.mxu0 0.0
  %292 = vmatprep.subr.mxu0 0.0
  %293 = vmatpush1.msra.mxu0 0.0
  %294 = vmatprep.subr.mxu0 0.0
  %295 = vmatpush1.msra.mxu0 0.0
  %296 = vmatprep.subr.mxu0 0.0
  %297 = vmatpush1.msra.mxu0 0.0
  %298 = vmatprep.mubr.f32.mxu0 0.0
  %299 = vmatmul.mubr.f32.gmra.mrb[0].mxu0 %v67
  %v300 = vpop.f32.mrb[0].mxu0
  %v301 = vadd.f32 0.0, %v300
  %v302 = vpop.f32.mrb[0].mxu0
  %303 = vmatprep.mubr.f32.mxu0 0.0
  %304 = vmatmul.mubr.f32.gmra.mrb[0].mxu0 %v70
  %v305 = vpop.f32.mrb[0].mxu0
  %v306 = vadd.f32 0.0, %v305
  %v307 = vpop.f32.mrb[0].mxu0
  %308 = vmatprep.mubr.f32.mxu0 0.0
  %309 = vmatmul.mubr.f32.gmra.mrb[0].mxu0 %v73
  %v310 = vpop.f32.mrb[0].mxu0
  %v311 = vadd.f32 0.0, %v310
  %v312 = vpop.f32.mrb[0].mxu0
  %313 = vmatprep.mubr.f32.mxu0 0.0
  %314 = vmatmul.mubr.f32.gmra.mrb[0].mxu0 %v76
  %v315 = vpop.f32.mrb[0].mxu0
  %v316 = vadd.f32 0.0, %v315
  %v317 = vpop.f32.mrb[0].mxu0
  %318 = vmatprep.mubr.f32.mxu0 0.0
  %319 = vmatmul.mubr.f32.gmra.mrb[0].mxu0 %v79
  %v320 = vpop.f32.mrb[0].mxu0
  %v321 = vadd.f32 0.0, %v320
  %v322 = vpop.f32.mrb[0].mxu0
  %323 = vmatprep.mubr.f32.mxu0 0.0
  %324 = vmatmul.mubr.f32.gmra.mrb[0].mxu0 %v82
  %v325 = vpop.f32.mrb[0].mxu0
  %v326 = vadd.f32 0.0, %v325
  %v327 = vpop.f32.mrb[0].mxu0
  %328 = vdwg.mxu0
  %s329 = scalar_lea.vmem %s0, 96
  %v330 = vld [vmem:[%s329] sm:$0xff]
  %v331 = vld [vmem:[%s329 + $0x8] sm:$0xff]
  %v332 = vld [vmem:[%s329 + $0x10] sm:$0xff]
  %v333 = vld [vmem:[%s329 + $0x18] sm:$0xff]
  %v334 = vld [vmem:[%s329 + $0x20] sm:$0xff]
  %v335 = vld [vmem:[%s329 + $0x28] sm:$0xff]
  %v336 = vadd.f32 %v330, %v301
  %v337 = vadd.f32 %v331, %v306
  %v338 = vxor.u32 %v336, 2147483648
  %v339 = vxor.u32 %v337, 2147483648
  %v340 = vmul.f32 %v338, 1.442695
  %v341 = vpow.pop %v340
  %v342 = vmul.f32 %v339, 1.442695
  %v343 = vpow.pop %v342
  %v344 = vadd.f32 %v341, 1.0
  %v345 = vadd.f32 %v343, 1.0
  %v346 = vrcp.pop %v344
  %v347 = vmul.f32 1.0, %v346
  %v348 = vrcp.pop %v345
  %v349 = vmul.f32 1.0, %v348
  %v350 = vadd.f32 %v332, %v311
  %v351 = vadd.f32 %v333, %v316
  %v352 = vxor.u32 %v350, 2147483648
  %v353 = vxor.u32 %v351, 2147483648
  %v354 = vmul.f32 %v352, 1.442695
  %v355 = vpow.pop %v354
  %v356 = vmul.f32 %v353, 1.442695
  %v357 = vpow.pop %v356
  %v358 = vadd.f32 %v355, 1.0
  %v359 = vadd.f32 %v357, 1.0
  %v360 = vrcp.pop %v358
  %v361 = vmul.f32 1.0, %v360
  %v362 = vrcp.pop %v359
  %v363 = vmul.f32 1.0, %v362
  %v364 = vadd.f32 %v321, %v20
  %v365 = vadd.f32 %v326, %v21
  %v366 = vmul.f32 %v347, %v364
  %v367 = vmul.f32 %v349, %v365
  %v368 = vadd.f32 %v334, %v366
  %v369 = vadd.f32 %v335, %v367
  %v370 = vtanh.pop %v368
  %v371 = vtanh.pop %v369
  %v372 = vsub.f32 1.0, %v361
  %v373 = vsub.f32 1.0, %v363
  %v374 = vmul.f32 %v372, %v370
  %v375 = vmul.f32 %v373, %v371
  %v376 = vmul.f32 %v361, %v228
  %v377 = vmul.f32 %v363, %v229
  %v378 = vadd.f32 %v374, %v376
  %v379 = vadd.f32 %v375, %v377
  %s380 = scalar_lea.vmem %s3, 32
  %381 = vst [vmem:[%s380] sm:$0xff] %v378
  %s382 = scalar_lea.vmem %s3, 80
  %383 = vst [vmem:[%s382 + $0x8] sm:$0xff] %v379
  %384 = vmatprep.subr.mxu0 0.0
  %385 = vmatpush1.msra.mxu0 %v378
  %386 = vmatprep.subr.mxu0 0.0
  %387 = vmatpush1.msra.mxu0 %v379
  %388 = vmatprep.subr.mxu0 0.0
  %389 = vmatpush1.msra.mxu0 0.0
  %390 = vmatprep.subr.mxu0 0.0
  %391 = vmatpush1.msra.mxu0 0.0
  %392 = vmatprep.subr.mxu0 0.0
  %393 = vmatpush1.msra.mxu0 0.0
  %394 = vmatprep.subr.mxu0 0.0
  %395 = vmatpush1.msra.mxu0 0.0
  %396 = vmatprep.subr.mxu0 0.0
  %397 = vmatpush1.msra.mxu0 0.0
  %398 = vmatprep.subr.mxu0 0.0
  %399 = vmatpush1.msra.mxu0 0.0
  %400 = vmatprep.subr.mxu0 0.0
  %401 = vmatpush1.msra.mxu0 0.0
  %402 = vmatprep.subr.mxu0 0.0
  %403 = vmatpush1.msra.mxu0 0.0
  %404 = vmatprep.subr.mxu0 0.0
  %405 = vmatpush1.msra.mxu0 0.0
  %406 = vmatprep.subr.mxu0 0.0
  %407 = vmatpush1.msra.mxu0 0.0
  %408 = vmatprep.subr.mxu0 0.0
  %409 = vmatpush1.msra.mxu0 0.0
  %410 = vmatprep.subr.mxu0 0.0
  %411 = vmatpush1.msra.mxu0 0.0
  %412 = vmatprep.subr.mxu0 0.0
  %413 = vmatpush1.msra.mxu0 0.0
  %414 = vmatprep.subr.mxu0 0.0
  %415 = vmatpush1.msra.mxu0 0.0
  %416 = vmatprep.subr.mxu0 0.0
  %417 = vmatpush1.msra.mxu0 0.0
  %418 = vmatprep.subr.mxu0 0.0
  %419 = vmatpush1.msra.mxu0 0.0
  %420 = vmatprep.subr.mxu0 0.0
  %421 = vmatpush1.msra.mxu0 0.0
  %422 = vmatprep.subr.mxu0 0.0
  %423 = vmatpush1.msra.mxu0 0.0
  %424 = vmatprep.subr.mxu0 0.0
  %425 = vmatpush1.msra.mxu0 0.0
  %426 = vmatprep.subr.mxu0 0.0
  %427 = vmatpush1.msra.mxu0 0.0
  %428 = vmatprep.subr.mxu0 0.0
  %429 = vmatpush1.msra.mxu0 0.0
  %430 = vmatprep.subr.mxu0 0.0
  %431 = vmatpush1.msra.mxu0 0.0
  %432 = vmatprep.subr.mxu0 0.0
  %433 = vmatpush1.msra.mxu0 0.0
  %434 = vmatprep.subr.mxu0 0.0
  %435 = vmatpush1.msra.mxu0 0.0
  %436 = vmatprep.subr.mxu0 0.0
  %437 = vmatpush1.msra.mxu0 0.0
  %438 = vmatprep.subr.mxu0 0.0
  %439 = vmatpush1.msra.mxu0 0.0
  %440 = vmatprep.subr.mxu0 0.0
  %441 = vmatpush1.msra.mxu0 0.0
  %442 = vmatprep.subr.mxu0 0.0
  %443 = vmatpush1.msra.mxu0 0.0
  %444 = vmatprep.subr.mxu0 0.0
  %445 = vmatpush1.msra.mxu0 0.0
  %446 = vmatprep.subr.mxu0 0.0
  %447 = vmatpush1.msra.mxu0 0.0
  %448 = vmatprep.mubr.f32.mxu0 0.0
  %449 = vmatmul.mubr.f32.gmra.mrb[0].mxu0 %v67
  %v450 = vpop.f32.mrb[0].mxu0
  %v451 = vadd.f32 0.0, %v450
  %v452 = vpop.f32.mrb[0].mxu0
  %453 = vmatprep.mubr.f32.mxu0 0.0
  %454 = vmatmul.mubr.f32.gmra.mrb[0].mxu0 %v70
  %v455 = vpop.f32.mrb[0].mxu0
  %v456 = vadd.f32 0.0, %v455
  %v457 = vpop.f32.mrb[0].mxu0
  %458 = vmatprep.mubr.f32.mxu0 0.0
  %459 = vmatmul.mubr.f32.gmra.mrb[0].mxu0 %v73
  %v460 = vpop.f32.mrb[0].mxu0
  %v461 = vadd.f32 0.0, %v460
  %v462 = vpop.f32.mrb[0].mxu0
  %463 = vmatprep.mubr.f32.mxu0 0.0
  %464 = vmatmul.mubr.f32.gmra.mrb[0].mxu0 %v76
  %v465 = vpop.f32.mrb[0].mxu0
  %v466 = vadd.f32 0.0, %v465
  %v467 = vpop.f32.mrb[0].mxu0
  %468 = vmatprep.mubr.f32.mxu0 0.0
  %469 = vmatmul.mubr.f32.gmra.mrb[0].mxu0 %v79
  %v470 = vpop.f32.mrb[0].mxu0
  %v471 = vadd.f32 0.0, %v470
  %v472 = vpop.f32.mrb[0].mxu0
  %473 = vmatprep.mubr.f32.mxu0 0.0
  %474 = vmatmul.mubr.f32.gmra.mrb[0].mxu0 %v82
  %v475 = vpop.f32.mrb[0].mxu0
  %v476 = vadd.f32 0.0, %v475
  %v477 = vpop.f32.mrb[0].mxu0
  %478 = vdwg.mxu0
  %s479 = scalar_lea.vmem %s0, 144
  %v480 = vld [vmem:[%s479] sm:$0xff]
  %v481 = vld [vmem:[%s479 + $0x8] sm:$0xff]
  %v482 = vld [vmem:[%s479 + $0x10] sm:$0xff]
  %v483 = vld [vmem:[%s479 + $0x18] sm:$0xff]
  %v484 = vld [vmem:[%s479 + $0x20] sm:$0xff]
  %v485 = vld [vmem:[%s479 + $0x28] sm:$0xff]
  %v486 = vadd.f32 %v480, %v451
  %v487 = vadd.f32 %v481, %v456
  %v488 = vxor.u32 %v486, 2147483648
  %v489 = vxor.u32 %v487, 2147483648
  %v490 = vmul.f32 %v488, 1.442695
  %v491 = vpow.pop %v490
  %v492 = vmul.f32 %v489, 1.442695
  %v493 = vpow.pop %v492
  %v494 = vadd.f32 %v491, 1.0
  %v495 = vadd.f32 %v493, 1.0
  %v496 = vrcp.pop %v494
  %v497 = vmul.f32 1.0, %v496
  %v498 = vrcp.pop %v495
  %v499 = vmul.f32 1.0, %v498
  %v500 = vadd.f32 %v482, %v461
  %v501 = vadd.f32 %v483, %v466
  %v502 = vxor.u32 %v500, 2147483648
  %v503 = vxor.u32 %v501, 2147483648
  %v504 = vmul.f32 %v502, 1.442695
  %v505 = vpow.pop %v504
  %v506 = vmul.f32 %v503, 1.442695
  %v507 = vpow.pop %v506
  %v508 = vadd.f32 %v505, 1.0
  %v509 = vadd.f32 %v507, 1.0
  %v510 = vrcp.pop %v508
  %v511 = vmul.f32 1.0, %v510
  %v512 = vrcp.pop %v509
  %v513 = vmul.f32 1.0, %v512
  %v514 = vadd.f32 %v471, %v20
  %v515 = vadd.f32 %v476, %v21
  %v516 = vmul.f32 %v497, %v514
  %v517 = vmul.f32 %v499, %v515
  %v518 = vadd.f32 %v484, %v516
  %v519 = vadd.f32 %v485, %v517
  %v520 = vtanh.pop %v518
  %v521 = vtanh.pop %v519
  %v522 = vsub.f32 1.0, %v511
  %v523 = vsub.f32 1.0, %v513
  %v524 = vmul.f32 %v522, %v520
  %v525 = vmul.f32 %v523, %v521
  %v526 = vmul.f32 %v511, %v378
  %v527 = vmul.f32 %v513, %v379
  %v528 = vadd.f32 %v524, %v526
  %v529 = vadd.f32 %v525, %v527
  %s530 = scalar_lea.vmem %s3, 48
  %531 = vst [vmem:[%s530] sm:$0xff] %v528
  %s532 = scalar_lea.vmem %s3, 64
  %533 = vst [vmem:[%s532 + $0x8] sm:$0xff] %v529
  %534 = vmatprep.subr.mxu0 0.0
  %535 = vmatpush1.msra.mxu0 %v528
  %536 = vmatprep.subr.mxu0 0.0
  %537 = vmatpush1.msra.mxu0 %v529
  %538 = vmatprep.subr.mxu0 0.0
  %539 = vmatpush1.msra.mxu0 0.0
  %540 = vmatprep.subr.mxu0 0.0
  %541 = vmatpush1.msra.mxu0 0.0
  %542 = vmatprep.subr.mxu0 0.0
  %543 = vmatpush1.msra.mxu0 0.0
  %544 = vmatprep.subr.mxu0 0.0
  %545 = vmatpush1.msra.mxu0 0.0
  %546 = vmatprep.subr.mxu0 0.0
  %547 = vmatpush1.msra.mxu0 0.0
  %548 = vmatprep.subr.mxu0 0.0
  %549 = vmatpush1.msra.mxu0 0.0
  %550 = vmatprep.subr.mxu0 0.0
  %551 = vmatpush1.msra.mxu0 0.0
  %552 = vmatprep.subr.mxu0 0.0
  %553 = vmatpush1.msra.mxu0 0.0
  %554 = vmatprep.subr.mxu0 0.0
  %555 = vmatpush1.msra.mxu0 0.0
  %556 = vmatprep.subr.mxu0 0.0
  %557 = vmatpush1.msra.mxu0 0.0
  %558 = vmatprep.subr.mxu0 0.0
  %559 = vmatpush1.msra.mxu0 0.0
  %560 = vmatprep.subr.mxu0 0.0
  %561 = vmatpush1.msra.mxu0 0.0
  %562 = vmatprep.subr.mxu0 0.0
  %563 = vmatpush1.msra.mxu0 0.0
  %564 = vmatprep.subr.mxu0 0.0
  %565 = vmatpush1.msra.mxu0 0.0
  %566 = vmatprep.subr.mxu0 0.0
  %567 = vmatpush1.msra.mxu0 0.0
  %568 = vmatprep.subr.mxu0 0.0
  %569 = vmatpush1.msra.mxu0 0.0
  %570 = vmatprep.subr.mxu0 0.0
  %571 = vmatpush1.msra.mxu0 0.0
  %572 = vmatprep.subr.mxu0 0.0
  %573 = vmatpush1.msra.mxu0 0.0
  %574 = vmatprep.subr.mxu0 0.0
  %575 = vmatpush1.msra.mxu0 0.0
  %576 = vmatprep.subr.mxu0 0.0
  %577 = vmatpush1.msra.mxu0 0.0
  %578 = vmatprep.subr.mxu0 0.0
  %579 = vmatpush1.msra.mxu0 0.0
  %580 = vmatprep.subr.mxu0 0.0
  %581 = vmatpush1.msra.mxu0 0.0
  %582 = vmatprep.subr.mxu0 0.0
  %583 = vmatpush1.msra.mxu0 0.0
  %584 = vmatprep.subr.mxu0 0.0
  %585 = vmatpush1.msra.mxu0 0.0
  %586 = vmatprep.subr.mxu0 0.0
  %587 = vmatpush1.msra.mxu0 0.0
  %588 = vmatprep.subr.mxu0 0.0
  %589 = vmatpush1.msra.mxu0 0.0
  %590 = vmatprep.subr.mxu0 0.0
  %591 = vmatpush1.msra.mxu0 0.0
  %592 = vmatprep.subr.mxu0 0.0
  %593 = vmatpush1.msra.mxu0 0.0
  %594 = vmatprep.subr.mxu0 0.0
  %595 = vmatpush1.msra.mxu0 0.0
  %596 = vmatprep.subr.mxu0 0.0
  %597 = vmatpush1.msra.mxu0 0.0
  %598 = vmatprep.mubr.f32.mxu0 0.0
  %599 = vmatmul.mubr.f32.gmra.mrb[0].mxu0 %v67
  %v600 = vpop.f32.mrb[0].mxu0
  %v601 = vadd.f32 0.0, %v600
  %v602 = vpop.f32.mrb[0].mxu0
  %603 = vmatprep.mubr.f32.mxu0 0.0
  %604 = vmatmul.mubr.f32.gmra.mrb[0].mxu0 %v70
  %v605 = vpop.f32.mrb[0].mxu0
  %v606 = vadd.f32 0.0, %v605
  %v607 = vpop.f32.mrb[0].mxu0
  %608 = vmatprep.mubr.f32.mxu0 0.0
  %609 = vmatmul.mubr.f32.gmra.mrb[0].mxu0 %v73
  %v610 = vpop.f32.mrb[0].mxu0
  %v611 = vadd.f32 0.0, %v610
  %v612 = vpop.f32.mrb[0].mxu0
  %613 = vmatprep.mubr.f32.mxu0 0.0
  %614 = vmatmul.mubr.f32.gmra.mrb[0].mxu0 %v76
  %v615 = vpop.f32.mrb[0].mxu0
  %v616 = vadd.f32 0.0, %v615
  %v617 = vpop.f32.mrb[0].mxu0
  %618 = vmatprep.mubr.f32.mxu0 0.0
  %619 = vmatmul.mubr.f32.gmra.mrb[0].mxu0 %v79
  %v620 = vpop.f32.mrb[0].mxu0
  %v621 = vadd.f32 0.0, %v620
  %v622 = vpop.f32.mrb[0].mxu0
  %623 = vmatprep.mubr.f32.mxu0 0.0
  %624 = vmatmul.mubr.f32.gmra.mrb[0].mxu0 %v82
  %v625 = vpop.f32.mrb[0].mxu0
  %v626 = vadd.f32 0.0, %v625
  %v627 = vpop.f32.mrb[0].mxu0
  %628 = vdwg.mxu0
  %s629 = scalar_lea.vmem %s0, 192
  %v630 = vld [vmem:[%s629] sm:$0xff]
  %v631 = vld [vmem:[%s629 + $0x8] sm:$0xff]
  %v632 = vld [vmem:[%s629 + $0x10] sm:$0xff]
  %v633 = vld [vmem:[%s629 + $0x18] sm:$0xff]
  %v634 = vld [vmem:[%s629 + $0x20] sm:$0xff]
  %v635 = vld [vmem:[%s629 + $0x28] sm:$0xff]
  %v636 = vadd.f32 %v630, %v601
  %v637 = vadd.f32 %v631, %v606
  %v638 = vxor.u32 %v636, 2147483648
  %v639 = vxor.u32 %v637, 2147483648
  %v640 = vmul.f32 %v638, 1.442695
  %v641 = vpow.pop %v640
  %v642 = vmul.f32 %v639, 1.442695
  %v643 = vpow.pop %v642
  %v644 = vadd.f32 %v641, 1.0
  %v645 = vadd.f32 %v643, 1.0
  %v646 = vrcp.pop %v644
  %v647 = vmul.f32 1.0, %v646
  %v648 = vrcp.pop %v645
  %v649 = vmul.f32 1.0, %v648
  %v650 = vadd.f32 %v632, %v611
  %v651 = vadd.f32 %v633, %v616
  %v652 = vxor.u32 %v650, 2147483648
  %v653 = vxor.u32 %v651, 2147483648
  %v654 = vmul.f32 %v652, 1.442695
  %v655 = vpow.pop %v654
  %v656 = vmul.f32 %v653, 1.442695
  %v657 = vpow.pop %v656
  %v658 = vadd.f32 %v655, 1.0
  %v659 = vadd.f32 %v657, 1.0
  %v660 = vrcp.pop %v658
  %v661 = vmul.f32 1.0, %v660
  %v662 = vrcp.pop %v659
  %v663 = vmul.f32 1.0, %v662
  %v664 = vadd.f32 %v621, %v20
  %v665 = vadd.f32 %v626, %v21
  %v666 = vmul.f32 %v647, %v664
  %v667 = vmul.f32 %v649, %v665
  %v668 = vadd.f32 %v634, %v666
  %v669 = vadd.f32 %v635, %v667
  %v670 = vtanh.pop %v668
  %v671 = vtanh.pop %v669
  %v672 = vsub.f32 1.0, %v661
  %v673 = vsub.f32 1.0, %v663
  %v674 = vmul.f32 %v672, %v670
  %v675 = vmul.f32 %v673, %v671
  %v676 = vmul.f32 %v661, %v528
  %v677 = vmul.f32 %v663, %v529
  %v678 = vadd.f32 %v674, %v676
  %v679 = vadd.f32 %v675, %v677
  %680 = vst [vmem:[%s532] sm:$0xff] %v678
  %681 = vst [vmem:[%s530 + $0x8] sm:$0xff] %v679
  %682 = vmatprep.subr.mxu0 0.0
  %683 = vmatpush1.msra.mxu0 %v678
  %684 = vmatprep.subr.mxu0 0.0
  %685 = vmatpush1.msra.mxu0 %v679
  %686 = vmatprep.subr.mxu0 0.0
  %687 = vmatpush1.msra.mxu0 0.0
  %688 = vmatprep.subr.mxu0 0.0
  %689 = vmatpush1.msra.mxu0 0.0
  %690 = vmatprep.subr.mxu0 0.0
  %691 = vmatpush1.msra.mxu0 0.0
  %692 = vmatprep.subr.mxu0 0.0
  %693 = vmatpush1.msra.mxu0 0.0
  %694 = vmatprep.subr.mxu0 0.0
  %695 = vmatpush1.msra.mxu0 0.0
  %696 = vmatprep.subr.mxu0 0.0
  %697 = vmatpush1.msra.mxu0 0.0
  %698 = vmatprep.subr.mxu0 0.0
  %699 = vmatpush1.msra.mxu0 0.0
  %700 = vmatprep.subr.mxu0 0.0
  %701 = vmatpush1.msra.mxu0 0.0
  %702 = vmatprep.subr.mxu0 0.0
  %703 = vmatpush1.msra.mxu0 0.0
  %704 = vmatprep.subr.mxu0 0.0
  %705 = vmatpush1.msra.mxu0 0.0
  %706 = vmatprep.subr.mxu0 0.0
  %707 = vmatpush1.msra.mxu0 0.0
  %708 = vmatprep.subr.mxu0 0.0
  %709 = vmatpush1.msra.mxu0 0.0
  %710 = vmatprep.subr.mxu0 0.0
  %711 = vmatpush1.msra.mxu0 0.0
  %712 = vmatprep.subr.mxu0 0.0
  %713 = vmatpush1.msra.mxu0 0.0
  %714 = vmatprep.subr.mxu0 0.0
  %715 = vmatpush1.msra.mxu0 0.0
  %716 = vmatprep.subr.mxu0 0.0
  %717 = vmatpush1.msra.mxu0 0.0
  %718 = vmatprep.subr.mxu0 0.0
  %719 = vmatpush1.msra.mxu0 0.0
  %720 = vmatprep.subr.mxu0 0.0
  %721 = vmatpush1.msra.mxu0 0.0
  %722 = vmatprep.subr.mxu0 0.0
  %723 = vmatpush1.msra.mxu0 0.0
  %724 = vmatprep.subr.mxu0 0.0
  %725 = vmatpush1.msra.mxu0 0.0
  %726 = vmatprep.subr.mxu0 0.0
  %727 = vmatpush1.msra.mxu0 0.0
  %728 = vmatprep.subr.mxu0 0.0
  %729 = vmatpush1.msra.mxu0 0.0
  %730 = vmatprep.subr.mxu0 0.0
  %731 = vmatpush1.msra.mxu0 0.0
  %732 = vmatprep.subr.mxu0 0.0
  %733 = vmatpush1.msra.mxu0 0.0
  %734 = vmatprep.subr.mxu0 0.0
  %735 = vmatpush1.msra.mxu0 0.0
  %736 = vmatprep.subr.mxu0 0.0
  %737 = vmatpush1.msra.mxu0 0.0
  %738 = vmatprep.subr.mxu0 0.0
  %739 = vmatpush1.msra.mxu0 0.0
  %740 = vmatprep.subr.mxu0 0.0
  %741 = vmatpush1.msra.mxu0 0.0
  %742 = vmatprep.subr.mxu0 0.0
  %743 = vmatpush1.msra.mxu0 0.0
  %744 = vmatprep.subr.mxu0 0.0
  %745 = vmatpush1.msra.mxu0 0.0
  %746 = vmatprep.mubr.f32.mxu0 0.0
  %747 = vmatmul.mubr.f32.gmra.mrb[0].mxu0 %v67
  %v748 = vpop.f32.mrb[0].mxu0
  %v749 = vadd.f32 0.0, %v748
  %v750 = vpop.f32.mrb[0].mxu0
  %751 = vmatprep.mubr.f32.mxu0 0.0
  %752 = vmatmul.mubr.f32.gmra.mrb[0].mxu0 %v70
  %v753 = vpop.f32.mrb[0].mxu0
  %v754 = vadd.f32 0.0, %v753
  %v755 = vpop.f32.mrb[0].mxu0
  %756 = vmatprep.mubr.f32.mxu0 0.0
  %757 = vmatmul.mubr.f32.gmra.mrb[0].mxu0 %v73
  %v758 = vpop.f32.mrb[0].mxu0
  %v759 = vadd.f32 0.0, %v758
  %v760 = vpop.f32.mrb[0].mxu0
  %761 = vmatprep.mubr.f32.mxu0 0.0
  %762 = vmatmul.mubr.f32.gmra.mrb[0].mxu0 %v76
  %v763 = vpop.f32.mrb[0].mxu0
  %v764 = vadd.f32 0.0, %v763
  %v765 = vpop.f32.mrb[0].mxu0
  %766 = vmatprep.mubr.f32.mxu0 0.0
  %767 = vmatmul.mubr.f32.gmra.mrb[0].mxu0 %v79
  %v768 = vpop.f32.mrb[0].mxu0
  %v769 = vadd.f32 0.0, %v768
  %v770 = vpop.f32.mrb[0].mxu0
  %771 = vmatprep.mubr.f32.mxu0 0.0
  %772 = vmatmul.mubr.f32.gmra.mrb[0].mxu0 %v82
  %v773 = vpop.f32.mrb[0].mxu0
  %v774 = vadd.f32 0.0, %v773
  %v775 = vpop.f32.mrb[0].mxu0
  %776 = vdwg.mxu0
  %s777 = scalar_lea.vmem %s0, 240
  %v778 = vld [vmem:[%s777] sm:$0xff]
  %v779 = vld [vmem:[%s777 + $0x8] sm:$0xff]
  %v780 = vld [vmem:[%s777 + $0x10] sm:$0xff]
  %v781 = vld [vmem:[%s777 + $0x18] sm:$0xff]
  %v782 = vld [vmem:[%s777 + $0x20] sm:$0xff]
  %v783 = vld [vmem:[%s777 + $0x28] sm:$0xff]
  %v784 = vadd.f32 %v778, %v749
  %v785 = vadd.f32 %v779, %v754
  %v786 = vxor.u32 %v784, 2147483648
  %v787 = vxor.u32 %v785, 2147483648
  %v788 = vmul.f32 %v786, 1.442695
  %v789 = vpow.pop %v788
  %v790 = vmul.f32 %v787, 1.442695
  %v791 = vpow.pop %v790
  %v792 = vadd.f32 %v789, 1.0
  %v793 = vadd.f32 %v791, 1.0
  %v794 = vrcp.pop %v792
  %v795 = vmul.f32 1.0, %v794
  %v796 = vrcp.pop %v793
  %v797 = vmul.f32 1.0, %v796
  %v798 = vadd.f32 %v780, %v759
  %v799 = vadd.f32 %v781, %v764
  %v800 = vxor.u32 %v798, 2147483648
  %v801 = vxor.u32 %v799, 2147483648
  %v802 = vmul.f32 %v800, 1.442695
  %v803 = vpow.pop %v802
  %v804 = vmul.f32 %v801, 1.442695
  %v805 = vpow.pop %v804
  %v806 = vadd.f32 %v803, 1.0
  %v807 = vadd.f32 %v805, 1.0
  %v808 = vrcp.pop %v806
  %v809 = vmul.f32 1.0, %v808
  %v810 = vrcp.pop %v807
  %v811 = vmul.f32 1.0, %v810
  %v812 = vadd.f32 %v769, %v20
  %v813 = vadd.f32 %v774, %v21
  %v814 = vmul.f32 %v795, %v812
  %v815 = vmul.f32 %v797, %v813
  %v816 = vadd.f32 %v782, %v814
  %v817 = vadd.f32 %v783, %v815
  %v818 = vtanh.pop %v816
  %v819 = vtanh.pop %v817
  %v820 = vsub.f32 1.0, %v809
  %v821 = vsub.f32 1.0, %v811
  %v822 = vmul.f32 %v820, %v818
  %v823 = vmul.f32 %v821, %v819
  %v824 = vmul.f32 %v809, %v678
  %v825 = vmul.f32 %v811, %v679
  %v826 = vadd.f32 %v822, %v824
  %v827 = vadd.f32 %v823, %v825
  %828 = vst [vmem:[%s382] sm:$0xff] %v826
  %829 = vst [vmem:[%s380 + $0x8] sm:$0xff] %v827
  %830 = vmatprep.subr.mxu0 0.0
  %831 = vmatpush1.msra.mxu0 %v826
  %832 = vmatprep.subr.mxu0 0.0
  %833 = vmatpush1.msra.mxu0 %v827
  %834 = vmatprep.subr.mxu0 0.0
  %835 = vmatpush1.msra.mxu0 0.0
  %836 = vmatprep.subr.mxu0 0.0
  %837 = vmatpush1.msra.mxu0 0.0
  %838 = vmatprep.subr.mxu0 0.0
  %839 = vmatpush1.msra.mxu0 0.0
  %840 = vmatprep.subr.mxu0 0.0
  %841 = vmatpush1.msra.mxu0 0.0
  %842 = vmatprep.subr.mxu0 0.0
  %843 = vmatpush1.msra.mxu0 0.0
  %844 = vmatprep.subr.mxu0 0.0
  %845 = vmatpush1.msra.mxu0 0.0
  %846 = vmatprep.subr.mxu0 0.0
  %847 = vmatpush1.msra.mxu0 0.0
  %848 = vmatprep.subr.mxu0 0.0
  %849 = vmatpush1.msra.mxu0 0.0
  %850 = vmatprep.subr.mxu0 0.0
  %851 = vmatpush1.msra.mxu0 0.0
  %852 = vmatprep.subr.mxu0 0.0
  %853 = vmatpush1.msra.mxu0 0.0
  %854 = vmatprep.subr.mxu0 0.0
  %855 = vmatpush1.msra.mxu0 0.0
  %856 = vmatprep.subr.mxu0 0.0
  %857 = vmatpush1.msra.mxu0 0.0
  %858 = vmatprep.subr.mxu0 0.0
  %859 = vmatpush1.msra.mxu0 0.0
  %860 = vmatprep.subr.mxu0 0.0
  %861 = vmatpush1.msra.mxu0 0.0
  %862 = vmatprep.subr.mxu0 0.0
  %863 = vmatpush1.msra.mxu0 0.0
  %864 = vmatprep.subr.mxu0 0.0
  %865 = vmatpush1.msra.mxu0 0.0
  %866 = vmatprep.subr.mxu0 0.0
  %867 = vmatpush1.msra.mxu0 0.0
  %868 = vmatprep.subr.mxu0 0.0
  %869 = vmatpush1.msra.mxu0 0.0
  %870 = vmatprep.subr.mxu0 0.0
  %871 = vmatpush1.msra.mxu0 0.0
  %872 = vmatprep.subr.mxu0 0.0
  %873 = vmatpush1.msra.mxu0 0.0
  %874 = vmatprep.subr.mxu0 0.0
  %875 = vmatpush1.msra.mxu0 0.0
  %876 = vmatprep.subr.mxu0 0.0
  %877 = vmatpush1.msra.mxu0 0.0
  %878 = vmatprep.subr.mxu0 0.0
  %879 = vmatpush1.msra.mxu0 0.0
  %880 = vmatprep.subr.mxu0 0.0
  %881 = vmatpush1.msra.mxu0 0.0
  %882 = vmatprep.subr.mxu0 0.0
  %883 = vmatpush1.msra.mxu0 0.0
  %884 = vmatprep.subr.mxu0 0.0
  %885 = vmatpush1.msra.mxu0 0.0
  %886 = vmatprep.subr.mxu0 0.0
  %887 = vmatpush1.msra.mxu0 0.0
  %888 = vmatprep.subr.mxu0 0.0
  %889 = vmatpush1.msra.mxu0 0.0
  %890 = vmatprep.subr.mxu0 0.0
  %891 = vmatpush1.msra.mxu0 0.0
  %892 = vmatprep.subr.mxu0 0.0
  %893 = vmatpush1.msra.mxu0 0.0
  %894 = vmatprep.mubr.f32.mxu0 0.0
  %895 = vmatmul.mubr.f32.gmra.mrb[0].mxu0 %v67
  %v896 = vpop.f32.mrb[0].mxu0
  %v897 = vadd.f32 0.0, %v896
  %v898 = vpop.f32.mrb[0].mxu0
  %899 = vmatprep.mubr.f32.mxu0 0.0
  %900 = vmatmul.mubr.f32.gmra.mrb[0].mxu0 %v70
  %v901 = vpop.f32.mrb[0].mxu0
  %v902 = vadd.f32 0.0, %v901
  %v903 = vpop.f32.mrb[0].mxu0
  %904 = vmatprep.mubr.f32.mxu0 0.0
  %905 = vmatmul.mubr.f32.gmra.mrb[0].mxu0 %v73
  %v906 = vpop.f32.mrb[0].mxu0
  %v907 = vadd.f32 0.0, %v906
  %v908 = vpop.f32.mrb[0].mxu0
  %909 = vmatprep.mubr.f32.mxu0 0.0
  %910 = vmatmul.mubr.f32.gmra.mrb[0].mxu0 %v76
  %v911 = vpop.f32.mrb[0].mxu0
  %v912 = vadd.f32 0.0, %v911
  %v913 = vpop.f32.mrb[0].mxu0
  %914 = vmatprep.mubr.f32.mxu0 0.0
  %915 = vmatmul.mubr.f32.gmra.mrb[0].mxu0 %v79
  %v916 = vpop.f32.mrb[0].mxu0
  %v917 = vadd.f32 0.0, %v916
  %v918 = vpop.f32.mrb[0].mxu0
  %919 = vmatprep.mubr.f32.mxu0 0.0
  %920 = vmatmul.mubr.f32.gmra.mrb[0].mxu0 %v82
  %v921 = vpop.f32.mrb[0].mxu0
  %v922 = vadd.f32 0.0, %v921
  %v923 = vpop.f32.mrb[0].mxu0
  %924 = vdwg.mxu0
  %s925 = scalar_lea.vmem %s0, 288
  %v926 = vld [vmem:[%s925] sm:$0xff]
  %v927 = vld [vmem:[%s925 + $0x8] sm:$0xff]
  %v928 = vld [vmem:[%s925 + $0x10] sm:$0xff]
  %v929 = vld [vmem:[%s925 + $0x18] sm:$0xff]
  %v930 = vld [vmem:[%s925 + $0x20] sm:$0xff]
  %v931 = vld [vmem:[%s925 + $0x28] sm:$0xff]
  %v932 = vadd.f32 %v926, %v897
  %v933 = vadd.f32 %v927, %v902
  %v934 = vxor.u32 %v932, 2147483648
  %v935 = vxor.u32 %v933, 2147483648
  %v936 = vmul.f32 %v934, 1.442695
  %v937 = vpow.pop %v936
  %v938 = vmul.f32 %v935, 1.442695
  %v939 = vpow.pop %v938
  %v940 = vadd.f32 %v937, 1.0
  %v941 = vadd.f32 %v939, 1.0
  %v942 = vrcp.pop %v940
  %v943 = vmul.f32 1.0, %v942
  %v944 = vrcp.pop %v941
  %v945 = vmul.f32 1.0, %v944
  %v946 = vadd.f32 %v928, %v907
  %v947 = vadd.f32 %v929, %v912
  %v948 = vxor.u32 %v946, 2147483648
  %v949 = vxor.u32 %v947, 2147483648
  %v950 = vmul.f32 %v948, 1.442695
  %v951 = vpow.pop %v950
  %v952 = vmul.f32 %v949, 1.442695
  %v953 = vpow.pop %v952
  %v954 = vadd.f32 %v951, 1.0
  %v955 = vadd.f32 %v953, 1.0
  %v956 = vrcp.pop %v954
  %v957 = vmul.f32 1.0, %v956
  %v958 = vrcp.pop %v955
  %v959 = vmul.f32 1.0, %v958
  %v960 = vadd.f32 %v917, %v20
  %v961 = vadd.f32 %v922, %v21
  %v962 = vmul.f32 %v943, %v960
  %v963 = vmul.f32 %v945, %v961
  %v964 = vadd.f32 %v930, %v962
  %v965 = vadd.f32 %v931, %v963
  %v966 = vtanh.pop %v964
  %v967 = vtanh.pop %v965
  %v968 = vsub.f32 1.0, %v957
  %v969 = vsub.f32 1.0, %v959
  %v970 = vmul.f32 %v968, %v966
  %v971 = vmul.f32 %v969, %v967
  %v972 = vmul.f32 %v957, %v826
  %v973 = vmul.f32 %v959, %v827
  %v974 = vadd.f32 %v970, %v972
  %v975 = vadd.f32 %v971, %v973
  %976 = vst [vmem:[%s232] sm:$0xff] %v974
  %977 = vst [vmem:[%s230 + $0x8] sm:$0xff] %v975
  %978 = vmatprep.subr.mxu0 0.0
  %979 = vmatpush1.msra.mxu0 %v974
  %980 = vmatprep.subr.mxu0 0.0
  %981 = vmatpush1.msra.mxu0 %v975
  %982 = vmatprep.subr.mxu0 0.0
  %983 = vmatpush1.msra.mxu0 0.0
  %984 = vmatprep.subr.mxu0 0.0
  %985 = vmatpush1.msra.mxu0 0.0
  %986 = vmatprep.subr.mxu0 0.0
  %987 = vmatpush1.msra.mxu0 0.0
  %988 = vmatprep.subr.mxu0 0.0
  %989 = vmatpush1.msra.mxu0 0.0
  %990 = vmatprep.subr.mxu0 0.0
  %991 = vmatpush1.msra.mxu0 0.0
  %992 = vmatprep.subr.mxu0 0.0
  %993 = vmatpush1.msra.mxu0 0.0
  %994 = vmatprep.subr.mxu0 0.0
  %995 = vmatpush1.msra.mxu0 0.0
  %996 = vmatprep.subr.mxu0 0.0
  %997 = vmatpush1.msra.mxu0 0.0
  %998 = vmatprep.subr.mxu0 0.0
  %999 = vmatpush1.msra.mxu0 0.0
  %1000 = vmatprep.subr.mxu0 0.0
  %1001 = vmatpush1.msra.mxu0 0.0
  %1002 = vmatprep.subr.mxu0 0.0
  %1003 = vmatpush1.msra.mxu0 0.0
  %1004 = vmatprep.subr.mxu0 0.0
  %1005 = vmatpush1.msra.mxu0 0.0
  %1006 = vmatprep.subr.mxu0 0.0
  %1007 = vmatpush1.msra.mxu0 0.0
  %1008 = vmatprep.subr.mxu0 0.0
  %1009 = vmatpush1.msra.mxu0 0.0
  %1010 = vmatprep.subr.mxu0 0.0
  %1011 = vmatpush1.msra.mxu0 0.0
  %1012 = vmatprep.subr.mxu0 0.0
  %1013 = vmatpush1.msra.mxu0 0.0
  %1014 = vmatprep.subr.mxu0 0.0
  %1015 = vmatpush1.msra.mxu0 0.0
  %1016 = vmatprep.subr.mxu0 0.0
  %1017 = vmatpush1.msra.mxu0 0.0
  %1018 = vmatprep.subr.mxu0 0.0
  %1019 = vmatpush1.msra.mxu0 0.0
  %1020 = vmatprep.subr.mxu0 0.0
  %1021 = vmatpush1.msra.mxu0 0.0
  %1022 = vmatprep.subr.mxu0 0.0
  %1023 = vmatpush1.msra.mxu0 0.0
  %1024 = vmatprep.subr.mxu0 0.0
  %1025 = vmatpush1.msra.mxu0 0.0
  %1026 = vmatprep.subr.mxu0 0.0
  %1027 = vmatpush1.msra.mxu0 0.0
  %1028 = vmatprep.subr.mxu0 0.0
  %1029 = vmatpush1.msra.mxu0 0.0
  %1030 = vmatprep.subr.mxu0 0.0
  %1031 = vmatpush1.msra.mxu0 0.0
  %1032 = vmatprep.subr.mxu0 0.0
  %1033 = vmatpush1.msra.mxu0 0.0
  %1034 = vmatprep.subr.mxu0 0.0
  %1035 = vmatpush1.msra.mxu0 0.0
  %1036 = vmatprep.subr.mxu0 0.0
  %1037 = vmatpush1.msra.mxu0 0.0
  %1038 = vmatprep.subr.mxu0 0.0
  %1039 = vmatpush1.msra.mxu0 0.0
  %1040 = vmatprep.subr.mxu0 0.0
  %1041 = vmatpush1.msra.mxu0 0.0
  %1042 = vmatprep.mubr.f32.mxu0 0.0
  %1043 = vmatmul.mubr.f32.gmra.mrb[0].mxu0 %v67
  %v1044 = vpop.f32.mrb[0].mxu0
  %v1045 = vadd.f32 0.0, %v1044
  %v1046 = vpop.f32.mrb[0].mxu0
  %1047 = vmatprep.mubr.f32.mxu0 0.0
  %1048 = vmatmul.mubr.f32.gmra.mrb[0].mxu0 %v70
  %v1049 = vpop.f32.mrb[0].mxu0
  %v1050 = vadd.f32 0.0, %v1049
  %v1051 = vpop.f32.mrb[0].mxu0
  %1052 = vmatprep.mubr.f32.mxu0 0.0
  %1053 = vmatmul.mubr.f32.gmra.mrb[0].mxu0 %v73
  %v1054 = vpop.f32.mrb[0].mxu0
  %v1055 = vadd.f32 0.0, %v1054
  %v1056 = vpop.f32.mrb[0].mxu0
  %1057 = vmatprep.mubr.f32.mxu0 0.0
  %1058 = vmatmul.mubr.f32.gmra.mrb[0].mxu0 %v76
  %v1059 = vpop.f32.mrb[0].mxu0
  %v1060 = vadd.f32 0.0, %v1059
  %v1061 = vpop.f32.mrb[0].mxu0
  %1062 = vmatprep.mubr.f32.mxu0 0.0
  %1063 = vmatmul.mubr.f32.gmra.mrb[0].mxu0 %v79
  %v1064 = vpop.f32.mrb[0].mxu0
  %v1065 = vadd.f32 0.0, %v1064
  %v1066 = vpop.f32.mrb[0].mxu0
  %1067 = vmatprep.mubr.f32.mxu0 0.0
  %1068 = vmatmul.mubr.f32.gmra.mrb[0].mxu0 %v82
  %v1069 = vpop.f32.mrb[0].mxu0
  %v1070 = vadd.f32 0.0, %v1069
  %v1071 = vpop.f32.mrb[0].mxu0
  %1072 = vdwg.mxu0
  %s1073 = scalar_lea.vmem %s0, 336
  %v1074 = vld [vmem:[%s1073] sm:$0xff]
  %v1075 = vld [vmem:[%s1073 + $0x8] sm:$0xff]
  %v1076 = vld [vmem:[%s1073 + $0x10] sm:$0xff]
  %v1077 = vld [vmem:[%s1073 + $0x18] sm:$0xff]
  %v1078 = vld [vmem:[%s1073 + $0x20] sm:$0xff]
  %v1079 = vld [vmem:[%s1073 + $0x28] sm:$0xff]
  %v1080 = vadd.f32 %v1074, %v1045
  %v1081 = vadd.f32 %v1075, %v1050
  %v1082 = vxor.u32 %v1080, 2147483648
  %v1083 = vxor.u32 %v1081, 2147483648
  %v1084 = vmul.f32 %v1082, 1.442695
  %v1085 = vpow.pop %v1084
  %v1086 = vmul.f32 %v1083, 1.442695
  %v1087 = vpow.pop %v1086
  %v1088 = vadd.f32 %v1085, 1.0
  %v1089 = vadd.f32 %v1087, 1.0
  %v1090 = vrcp.pop %v1088
  %v1091 = vmul.f32 1.0, %v1090
  %v1092 = vrcp.pop %v1089
  %v1093 = vmul.f32 1.0, %v1092
  %v1094 = vadd.f32 %v1076, %v1055
  %v1095 = vadd.f32 %v1077, %v1060
  %v1096 = vxor.u32 %v1094, 2147483648
  %v1097 = vxor.u32 %v1095, 2147483648
  %v1098 = vmul.f32 %v1096, 1.442695
  %v1099 = vpow.pop %v1098
  %v1100 = vmul.f32 %v1097, 1.442695
  %v1101 = vpow.pop %v1100
  %v1102 = vadd.f32 %v1099, 1.0
  %v1103 = vadd.f32 %v1101, 1.0
  %v1104 = vrcp.pop %v1102
  %v1105 = vmul.f32 1.0, %v1104
  %v1106 = vrcp.pop %v1103
  %v1107 = vmul.f32 1.0, %v1106
  %v1108 = vadd.f32 %v1065, %v20
  %v1109 = vadd.f32 %v1070, %v21
  %v1110 = vmul.f32 %v1091, %v1108
  %v1111 = vmul.f32 %v1093, %v1109
  %v1112 = vadd.f32 %v1078, %v1110
  %v1113 = vadd.f32 %v1079, %v1111
  %v1114 = vtanh.pop %v1112
  %v1115 = vtanh.pop %v1113
  %v1116 = vsub.f32 1.0, %v1105
  %v1117 = vsub.f32 1.0, %v1107
  %v1118 = vmul.f32 %v1116, %v1114
  %v1119 = vmul.f32 %v1117, %v1115
  %v1120 = vmul.f32 %v1105, %v974
  %v1121 = vmul.f32 %v1107, %v975
  %v1122 = vadd.f32 %v1118, %v1120
  %v1123 = vadd.f32 %v1119, %v1121
  %1124 = vst [vmem:[%s63] sm:$0xff] %v1122
  %1125 = vst [vmem:[%s3 + $0x8] sm:$0xff] %v1123
  // Predicated region
  $region14: #{renet_forward.2} parent=0 // pred_check
    _
  $region15: #{renet_forward.2} parent=0 // pred_check_branch
    %1127 = sbr.rel (0) target = $region17
  $region16: #{renet_forward.2} parent=0 // pred_region
    _
  $region17: #{renet_forward.2} parent=0 // pred_fallthru
    _
  // Predicated region
  $region18: #{renet_forward.2} parent=0 // pred_check
    _
  $region19: #{renet_forward.2} parent=0 // pred_check_branch
    %1129 = sbr.rel (0) target = $region21
  $region20: #{renet_forward.2} parent=0 // pred_region
    _
  $region21: #{renet_forward.2} parent=0 // pred_fallthru
    _

</llo_original>
